<compile_context>
chip_gen: v7x
topology: tpu7x:2x2x1
jax: 0.10.0
libtpu: 0.0.40
codegen_flags: <defaults>
</compile_context>

<pallas_src>
from functools import partial

import numpy as np
import jax
import jax.numpy as jnp
from jax.experimental import pallas as pl
from jax.experimental.pallas import tpu as pltpu

LOG2 = float(np.log(2.0))


def ssp(v):
    # shifted softplus: log(1 + exp(v)) - log(2), numerically stable (reference only)
    return jnp.maximum(v, 0.0) + jnp.log(1.0 + jnp.exp(-jnp.abs(v))) - LOG2


def _softplus(v):
    # plain softplus -- the -log(2) shift is folded into the next dense layer's bias
    return jnp.maximum(v, 0.0) + jnp.log(1.0 + jnp.exp(-jnp.abs(v)))


def _round_up(v, m):
    return ((v + m - 1) // m) * m


# --------------------------------------------------------------------------------------
# Fused kernel: one grid step processes `bb` batch elements.
# --------------------------------------------------------------------------------------
def _schnorb_kernel(gcat_ref, gsum_ref, sred_ref, fij_ref, x_ref,
                    wf1, bf1, wf2, bf2, w1c, b1c, wp2, bp2, we2, be2,
                    out_ref, *, bb, AMp, Fp, cdt):
    # gcat_ref : (2*bb*AMp, bb*Ap)  rows [0, bb*AMp)        -> one-hot of neighbor j
    #                               rows [bb*AMp, 2*bb*AMp) -> one-hot of center  k
    #                               (block-diagonal over the bb batch elements)
    # gsum_ref : (bb*AMp, bb*Ap)    one-hot(j) + one-hot(k)  (p_j_env + p_i_env pick)
    # sred_ref : (Ap, AMp)          sums the A-1 neighbors of each atom
    # fij_ref  : (bb*AMp, R)        x_ref : (bb*Ap, 3*Fp)   (d-major lanes)
    # out_ref  : (bb*AMp, 3*Fp)     lanes [d*Fp:(d+1)*Fp] = direction d
    f32 = jnp.float32

    # --- filter network: W = Dense(softplus(Dense(f_ij)))  (log2 shift folded) ------
    t = jnp.dot(fij_ref[...], wf1[...], preferred_element_type=f32) + bf1[...]
    w = jnp.dot(_softplus(t).astype(cdt), wf2[...], preferred_element_type=f32) + bf2[...]

    # --- gather x_j / x_k for every (batch, pair) and all 3 directions: ONE dot ------
    xx = jnp.dot(gcat_ref[...], x_ref[...], preferred_element_type=f32)   # (2*bb*AMp, 3Fp)

    # --- h_ij = x_k * W * x_j, stacked along sublanes as (bb*3*AMp, Fp) --------------
    hs = []
    for b in range(bb):                                     # static, tiny loops
        wb = w[b * AMp:(b + 1) * AMp, :]
        for d in range(3):
            xj = xx[b * AMp:(b + 1) * AMp, d * Fp:(d + 1) * Fp]
            xk = xx[(bb + b) * AMp:(bb + b + 1) * AMp, d * Fp:(d + 1) * Fp]
            hs.append(xj * wb * xk)
    h = jnp.concatenate(hs, axis=0)                          # rows ordered (b, d, k, l)

    # --- pairnet / envnet, first layers fused along lanes (Fp -> 2*Fp) ---------------
    t1 = _softplus(jnp.dot(h.astype(cdt), w1c[...], preferred_element_type=f32) + b1c[...])
    pair = jnp.dot(t1[:, :Fp].astype(cdt), wp2[...], preferred_element_type=f32) + bp2[...]
    env = jnp.dot(t1[:, Fp:].astype(cdt), we2[...], preferred_element_type=f32) + be2[...]
    env_c = env.astype(cdt)
    sred = sred_ref[...]

    # --- p_i_env (sum over neighbors l) and lane-concat of the pair term -------------
    pies, pairs = [], []
    for b in range(bb):
        pies.append(jnp.concatenate(
            [jnp.dot(sred, env_c[(3 * b + d) * AMp:(3 * b + d + 1) * AMp, :],
                     preferred_element_type=f32) for d in range(3)], axis=1))   # (Ap, 3Fp)
        pairs.append(jnp.concatenate(
            [pair[(3 * b + d) * AMp:(3 * b + d + 1) * AMp, :] for d in range(3)], axis=1))
    pie_all = jnp.concatenate(pies, axis=0)                  # (bb*Ap,  3Fp)
    out_pair = jnp.concatenate(pairs, axis=0)                # (bb*AMp, 3Fp)

    # --- p_ij = pair + p_j_env + p_i_env; lane-dense (bb*AMp, 3Fp) store -------------
    out_ref[...] = out_pair + jnp.dot(gsum_ref[...], pie_all.astype(cdt),
                                      preferred_element_type=f32)


# --------------------------------------------------------------------------------------
# Wrapper
# --------------------------------------------------------------------------------------
def schnorb_interaction(x, f_ij, neighbors, params,
                        mxu_dtype=jnp.float32, batch_block=1):
    B, A, three, F = x.shape
    Am1 = A - 1
    AM = A * Am1
    R = f_ij.shape[-1]
    bb = int(batch_block)
    assert three == 3 and B % bb == 0

    AMp = _round_up(AM, 16)     # sublane-aligned pair tiles (16: bf16-pack safe)
    Ap = _round_up(A, 8)        # sublane-aligned atom tiles
    Fp = _round_up(F, 128)      # lane-aligned feature tiles (3*Fp lane-dense output)
    cdt = mxu_dtype

    (wf1, bf1, wf2, bf2, wp1, bp1, wp2, bp2, we1, be1, we2, be2) = params

    # fold the -log(2) shifted-softplus offset into the second dense layer's bias
    bf2 = bf2 - LOG2 * jnp.sum(wf2, axis=0, keepdims=True)
    bp2 = bp2 - LOG2 * jnp.sum(wp2, axis=0, keepdims=True)
    be2 = be2 - LOG2 * jnp.sum(we2, axis=0, keepdims=True)

    def padw(a, r, c):
        return jnp.pad(a, ((0, r - a.shape[0]), (0, c - a.shape[1])))

    # weights in the MXU dtype; biases stay f32 (added after the f32 accumulation)
    w1c = jnp.concatenate([padw(wp1, Fp, Fp), padw(we1, Fp, Fp)], axis=1).astype(cdt)
    b1c = jnp.concatenate([padw(bp1, 1, Fp), padw(be1, 1, Fp)], axis=1)
    param_arrays = [padw(wf1, R, Fp).astype(cdt), padw(bf1, 1, Fp),
                    padw(wf2, Fp, Fp).astype(cdt), padw(bf2, 1, Fp),
                    w1c, b1c,
                    padw(wp2, Fp, Fp).astype(cdt), padw(bp2, 1, Fp),
                    padw(we2, Fp, Fp).astype(cdt), padw(be2, 1, Fp)]

    # host-built one-hot gather / reduction matrices (depend only on `neighbors`);
    # padded pair rows / atom columns are all-zero so they contribute nothing.
    nbr = np.asarray(neighbors).reshape(A, Am1)
    idx_j = nbr.reshape(-1).astype(np.int64)
    idx_k = np.repeat(np.arange(A), Am1)
    g_j = np.zeros((AMp, Ap), np.float32); g_j[np.arange(AM), idx_j] = 1.0
    g_k = np.zeros((AMp, Ap), np.float32); g_k[np.arange(AM), idx_k] = 1.0
    eye_bb = np.eye(bb, dtype=np.float32)
    gcat = jnp.asarray(np.concatenate([np.kron(eye_bb, g_j),
                                       np.kron(eye_bb, g_k)], axis=0), dtype=cdt)
    gsum = jnp.asarray(np.kron(eye_bb, g_j + g_k), dtype=cdt)
    sred_np = np.zeros((Ap, AMp), np.float32); sred_np[idx_k, np.arange(AM)] = 1.0
    sred = jnp.asarray(sred_np, dtype=cdt)

    # streamed inputs: padded, flat (batch-major rows), MXU dtype
    fij_flat = jnp.pad(f_ij.reshape(B, AM, R), ((0, 0), (0, AMp - AM), (0, 0))
                       ).reshape(B * AMp, R).astype(cdt)
    x_flat = jnp.pad(x, ((0, 0), (0, Ap - A), (0, 0), (0, Fp - F))
                     ).reshape(B * Ap, 3 * Fp).astype(cdt)

    const_spec = lambda arr: pl.BlockSpec(arr.shape, lambda b: (0, 0))
    in_specs = ([const_spec(gcat), const_spec(gsum), const_spec(sred),
                 pl.BlockSpec((bb * AMp, R), lambda b: (b, 0)),
                 pl.BlockSpec((bb * Ap, 3 * Fp), lambda b: (b, 0))]
                + [const_spec(p) for p in param_arrays])

    # advisory cost estimate (padded shapes)
    m_rows = B * AMp
    flops = 2 * m_rows * (R * Fp + Fp * Fp)                      # filter network
    flops += 2 * (2 * m_rows) * (bb * Ap) * (3 * Fp)             # x_j / x_k gather
    flops += 2 * (3 * m_rows) * Fp * (2 * Fp)                    # pair/env layer 1
    flops += 2 * (3 * m_rows) * Fp * Fp * 2                      # pair/env layer 2
    flops += 2 * 3 * B * Ap * AMp * Fp                           # p_i_env reduction
    flops += 2 * m_rows * (bb * Ap) * (3 * Fp)                   # p_j_env / p_i_env add
    transcendentals = 2 * m_rows * Fp * 7                        # exp+log per softplus elt
    bytes_accessed = int(fij_flat.size * fij_flat.dtype.itemsize
                         + x_flat.size * x_flat.dtype.itemsize
                         + m_rows * 3 * Fp * 4
                         + sum(int(p.size) * p.dtype.itemsize for p in param_arrays)
                         + int(gcat.size + gsum.size + sred.size) * gcat.dtype.itemsize)

    # explicit scoped-VMEM budget: generous, but always below physical capacity
    try:
        cap = int(getattr(pltpu.get_tpu_info(), "vmem_capacity_bytes", 64 << 20))
    except Exception:
        cap = 64 << 20
    vmem_limit = int(min(100 << 20, max(32 << 20, cap - (16 << 20))))

    out_flat = pl.pallas_call(
        partial(_schnorb_kernel, bb=bb, AMp=AMp, Fp=Fp, cdt=cdt),
        grid=(B // bb,),
        in_specs=in_specs,
        out_specs=pl.BlockSpec((bb * AMp, 3 * Fp), lambda b: (b, 0)),
        out_shape=jax.ShapeDtypeStruct((B * AMp, 3 * Fp), jnp.float32),
        compiler_params=pltpu.CompilerParams(dimension_semantics=("parallel",),
                                             vmem_limit_bytes=vmem_limit),
        cost_estimate=pl.CostEstimate(flops=int(flops),
                                      transcendentals=int(transcendentals),
                                      bytes_accessed=int(bytes_accessed)),
    )(gcat, gsum, sred, fij_flat, x_flat, *param_arrays)

    # back to the torch layout (B, A, A-1, 3, F); padding is sliced away
    out = out_flat.reshape(B, AMp, 3, Fp)[:, :AM, :, :F]
    return out.reshape(B, A, Am1, 3, F)


# --------------------------------------------------------------------------------------
# Pure-JAX reference (mirrors the PyTorch forward)
# --------------------------------------------------------------------------------------
def _dense2(h, w1, b1, w2, b2):
    t = ssp(jnp.einsum('...i,ij->...j', h, w1) + b1)
    return jnp.einsum('...i,ij->...j', t, w2) + b2


def reference(x, f_ij, neighbors, params):
    (wf1, bf1, wf2, bf2, wp1, bp1, wp2, bp2, we1, be1, we2, be2) = params
    B, A, three, F = x.shape
    Am1 = A - 1
    idx_j = neighbors.reshape(-1)
    W = _dense2(f_ij, wf1, bf1, wf2, bf2)                               # (B,A,Am1,F)
    xj = x[:, idx_j].reshape(B, A, Am1, three, F)
    h_ij = x[:, :, None, :, :] * W[:, :, :, None, :] * xj               # (B,A,Am1,3,F)
    pp = _dense2(h_ij, wp1, bp1, wp2, bp2)
    pe = _dense2(h_ij, we1, be1, we2, be2)
    p_i_env = jnp.sum(pe, axis=2, keepdims=True)                        # (B,A,1,3,F)
    p_j_env = p_i_env[:, idx_j, 0].reshape(B, A, Am1, three, F)
    return pp + p_j_env + p_i_env


# --------------------------------------------------------------------------------------
if __name__ == "__main__":
    B, A, F, R = 2, 4, 32, 16          # batch, n_atoms, n_factors, n_rbf
    Am1 = A - 1

    key = jax.random.PRNGKey(0)
    ks = jax.random.split(key, 14)

    def init_dense(kw, kb, din, dout):
        w = (jax.random.normal(kw, (din, dout), jnp.float32) / np.sqrt(din)).astype(jnp.float32)
        b = (0.1 * jax.random.normal(kb, (1, dout), jnp.float32)).astype(jnp.float32)
        return w, b

    wf1, bf1 = init_dense(ks[0], ks[1], R, F)     # filter_network
    wf2, bf2 = init_dense(ks[2], ks[3], F, F)
    wp1, bp1 = init_dense(ks[4], ks[5], F, F)     # pairnet
    wp2, bp2 = init_dense(ks[6], ks[7], F, F)
    we1, be1 = init_dense(ks[8], ks[9], F, F)     # envnet
    we2, be2 = init_dense(ks[10], ks[11], F, F)
    # TODO(synk): self.f2out is defined in __init__ but never used in forward; omitted.
    params = (wf1, bf1, wf2, bf2, wp1, bp1, wp2, bp2, we1, be1, we2, be2)

    x = jax.random.normal(ks[12], (B, A, 3, F), jnp.float32)
    f_ij = jax.random.normal(ks[13], (B, A, Am1, R), jnp.float32)

    # neighbors[k, l] = index of the l-th neighbor of atom k (all atoms except k)
    nbr_np = np.zeros((A, Am1), dtype=np.int32)
    for kk in range(A):
        nbr_np[kk] = [l if l < kk else l + 1 for l in range(Am1)]
    neighbors = jnp.asarray(nbr_np)

    ref = reference(x, f_ij, neighbors, params)

    # f32 MXU path, 1 batch element per grid step: tight check.
    out_f32 = jax.block_until_ready(
        schnorb_interaction(x, f_ij, neighbors, params,
                            mxu_dtype=jnp.float32, batch_block=1))
    assert out_f32.shape == (B, A, Am1, 3, F)
    np.testing.assert_allclose(np.asarray(out_f32), np.asarray(ref), rtol=2e-3, atol=2e-3)

    # f32 path with 2 batch elements fused per grid step (small-A / v5e-v6e mode).
    out_f32_b2 = jax.block_until_ready(
        schnorb_interaction(x, f_ij, neighbors, params,
                            mxu_dtype=jnp.float32, batch_block=2))
    np.testing.assert_allclose(np.asarray(out_f32_b2), np.asarray(ref), rtol=2e-3, atol=2e-3)

    # bf16 MXU / bf16 streaming path (v6e/v7x throughput mode): loose sanity check.
    out_bf16 = jax.block_until_ready(
        schnorb_interaction(x, f_ij, neighbors, params,
                            mxu_dtype=jnp.bfloat16, batch_block=2))
    np.testing.assert_allclose(np.asarray(out_bf16), np.asarray(ref), rtol=1e-1, atol=1e-1)

    print("KERNEL_OK")
</pallas_src>

<mosaic_0001>
module attributes {stable_mosaic.version = 11 : i64} {
  func.func @_schnorb_kernel(%arg0: i32, %arg1: memref<32x8xf32, #tpu.memory_space<vmem>>, %arg2: memref<16x8xf32, #tpu.memory_space<vmem>>, %arg3: memref<8x16xf32, #tpu.memory_space<vmem>>, %arg4: memref<16x16xf32, #tpu.memory_space<vmem>>, %arg5: memref<8x384xf32, #tpu.memory_space<vmem>>, %arg6: memref<16x128xf32, #tpu.memory_space<vmem>>, %arg7: memref<1x128xf32, #tpu.memory_space<vmem>>, %arg8: memref<128x128xf32, #tpu.memory_space<vmem>>, %arg9: memref<1x128xf32, #tpu.memory_space<vmem>>, %arg10: memref<128x256xf32, #tpu.memory_space<vmem>>, %arg11: memref<1x256xf32, #tpu.memory_space<vmem>>, %arg12: memref<128x128xf32, #tpu.memory_space<vmem>>, %arg13: memref<1x128xf32, #tpu.memory_space<vmem>>, %arg14: memref<128x128xf32, #tpu.memory_space<vmem>>, %arg15: memref<1x128xf32, #tpu.memory_space<vmem>>, %arg16: memref<16x384xf32, #tpu.memory_space<vmem>>) attributes {dimension_semantics = [#tpu.dimension_semantics<parallel>], iteration_bounds = array<i64: 2>, scalar_prefetch = 0 : i64, scratch_operands = 0 : i64, tpu.core_type = #tpu.core_type<tc>, window_params = [{pipeline_mode = #tpu.pipeline_mode<synchronous>, transform_indices = @transform_0, window_bounds = array<i64: 32, 8>}, {pipeline_mode = #tpu.pipeline_mode<synchronous>, transform_indices = @transform_1, window_bounds = array<i64: 16, 8>}, {pipeline_mode = #tpu.pipeline_mode<synchronous>, transform_indices = @transform_2, window_bounds = array<i64: 8, 16>}, {transform_indices = @transform_3, window_bounds = array<i64: 16, 16>}, {transform_indices = @transform_4, window_bounds = array<i64: 8, 384>}, {pipeline_mode = #tpu.pipeline_mode<synchronous>, transform_indices = @transform_5, window_bounds = array<i64: 16, 128>}, {pipeline_mode = #tpu.pipeline_mode<synchronous>, transform_indices = @transform_6, window_bounds = array<i64: 1, 128>}, {pipeline_mode = #tpu.pipeline_mode<synchronous>, transform_indices = @transform_7, window_bounds = array<i64: 128, 128>}, {pipeline_mode = #tpu.pipeline_mode<synchronous>, transform_indices = @transform_8, window_bounds = array<i64: 1, 128>}, {pipeline_mode = #tpu.pipeline_mode<synchronous>, transform_indices = @transform_9, window_bounds = array<i64: 128, 256>}, {pipeline_mode = #tpu.pipeline_mode<synchronous>, transform_indices = @transform_10, window_bounds = array<i64: 1, 256>}, {pipeline_mode = #tpu.pipeline_mode<synchronous>, transform_indices = @transform_11, window_bounds = array<i64: 128, 128>}, {pipeline_mode = #tpu.pipeline_mode<synchronous>, transform_indices = @transform_12, window_bounds = array<i64: 1, 128>}, {pipeline_mode = #tpu.pipeline_mode<synchronous>, transform_indices = @transform_13, window_bounds = array<i64: 128, 128>}, {pipeline_mode = #tpu.pipeline_mode<synchronous>, transform_indices = @transform_14, window_bounds = array<i64: 1, 128>}, {transform_indices = @transform_15, window_bounds = array<i64: 16, 384>}]} {
    %c0 = arith.constant 0 : index
    %c0_0 = arith.constant 0 : index
    %0 = vector.load %arg4[%c0, %c0_0] : memref<16x16xf32, #tpu.memory_space<vmem>>, vector<16x16xf32>
    %c0_1 = arith.constant 0 : index
    %c0_2 = arith.constant 0 : index
    %1 = vector.load %arg6[%c0_1, %c0_2] : memref<16x128xf32, #tpu.memory_space<vmem>>, vector<16x128xf32>
    %cst = arith.constant dense<0.000000e+00> : vector<16x128xf32>
    %2 = tpu.matmul %0, %1, %cst {dimension_numbers = #tpu.dot_dimension_numbers<[1], [0], [0], [1], [0, 0, 1, 1], [], []>} : vector<16x16xf32>, vector<16x128xf32>, vector<16x128xf32> -> vector<16x128xf32>
    %c0_3 = arith.constant 0 : index
    %c0_4 = arith.constant 0 : index
    %3 = vector.load %arg7[%c0_3, %c0_4] : memref<1x128xf32, #tpu.memory_space<vmem>>, vector<1x128xf32>
    %4 = vector.broadcast %3 : vector<1x128xf32> to vector<16x128xf32>
    %5 = arith.addf %2, %4 : vector<16x128xf32>
    %cst_5 = arith.constant 0.000000e+00 : f32
    %6 = vector.broadcast %cst_5 : f32 to vector<16x128xf32>
    %7 = arith.maximumf %5, %6 : vector<16x128xf32>
    %8 = math.absf %5 : vector<16x128xf32>
    %cst_6 = arith.constant 0.000000e+00 : f32
    %9 = vector.broadcast %cst_6 : f32 to vector<16x128xf32>
    %10 = arith.subf %9, %8 : vector<16x128xf32>
    %11 = math.exp %10 : vector<16x128xf32>
    %cst_7 = arith.constant 1.000000e+00 : f32
    %12 = vector.broadcast %cst_7 : f32 to vector<16x128xf32>
    %13 = arith.addf %12, %11 : vector<16x128xf32>
    %14 = math.log %13 : vector<16x128xf32>
    %15 = arith.addf %7, %14 : vector<16x128xf32>
    %c0_8 = arith.constant 0 : index
    %c0_9 = arith.constant 0 : index
    %16 = vector.load %arg8[%c0_8, %c0_9] : memref<128x128xf32, #tpu.memory_space<vmem>>, vector<128x128xf32>
    %cst_10 = arith.constant dense<0.000000e+00> : vector<16x128xf32>
    %17 = tpu.matmul %15, %16, %cst_10 {dimension_numbers = #tpu.dot_dimension_numbers<[1], [0], [0], [1], [0, 0, 1, 1], [], []>} : vector<16x128xf32>, vector<128x128xf32>, vector<16x128xf32> -> vector<16x128xf32>
    %c0_11 = arith.constant 0 : index
    %c0_12 = arith.constant 0 : index
    %18 = vector.load %arg9[%c0_11, %c0_12] : memref<1x128xf32, #tpu.memory_space<vmem>>, vector<1x128xf32>
    %19 = vector.broadcast %18 : vector<1x128xf32> to vector<16x128xf32>
    %20 = arith.addf %17, %19 : vector<16x128xf32>
    %c0_13 = arith.constant 0 : index
    %c0_14 = arith.constant 0 : index
    %21 = vector.load %arg1[%c0_13, %c0_14] : memref<32x8xf32, #tpu.memory_space<vmem>>, vector<32x8xf32>
    %c0_15 = arith.constant 0 : index
    %c0_16 = arith.constant 0 : index
    %22 = vector.load %arg5[%c0_15, %c0_16] : memref<8x384xf32, #tpu.memory_space<vmem>>, vector<8x384xf32>
    %cst_17 = arith.constant dense<0.000000e+00> : vector<32x384xf32>
    %23 = tpu.matmul %21, %22, %cst_17 {dimension_numbers = #tpu.dot_dimension_numbers<[1], [0], [0], [1], [0, 0, 1, 1], [], []>} : vector<32x8xf32>, vector<8x384xf32>, vector<32x384xf32> -> vector<32x384xf32>
    %24 = vector.extract_strided_slice %23 {offsets = [0, 0], sizes = [16, 128], strides = [1, 1]} : vector<32x384xf32> to vector<16x128xf32>
    %25 = vector.extract_strided_slice %23 {offsets = [16, 0], sizes = [16, 128], strides = [1, 1]} : vector<32x384xf32> to vector<16x128xf32>
    %26 = arith.mulf %24, %20 : vector<16x128xf32>
    %27 = arith.mulf %26, %25 : vector<16x128xf32>
    %28 = vector.extract_strided_slice %23 {offsets = [0, 128], sizes = [16, 128], strides = [1, 1]} : vector<32x384xf32> to vector<16x128xf32>
    %29 = vector.extract_strided_slice %23 {offsets = [16, 128], sizes = [16, 128], strides = [1, 1]} : vector<32x384xf32> to vector<16x128xf32>
    %30 = arith.mulf %28, %20 : vector<16x128xf32>
    %31 = arith.mulf %30, %29 : vector<16x128xf32>
    %32 = vector.extract_strided_slice %23 {offsets = [0, 256], sizes = [16, 128], strides = [1, 1]} : vector<32x384xf32> to vector<16x128xf32>
    %33 = vector.extract_strided_slice %23 {offsets = [16, 256], sizes = [16, 128], strides = [1, 1]} : vector<32x384xf32> to vector<16x128xf32>
    %34 = arith.mulf %32, %20 : vector<16x128xf32>
    %35 = arith.mulf %34, %33 : vector<16x128xf32>
    %36 = tpu.concatenate %27, %31, %35 in 0 : vector<16x128xf32>, vector<16x128xf32>, vector<16x128xf32> -> vector<48x128xf32>
    %c0_18 = arith.constant 0 : index
    %c0_19 = arith.constant 0 : index
    %37 = vector.load %arg10[%c0_18, %c0_19] : memref<128x256xf32, #tpu.memory_space<vmem>>, vector<128x256xf32>
    %cst_20 = arith.constant dense<0.000000e+00> : vector<48x256xf32>
    %38 = tpu.matmul %36, %37, %cst_20 {dimension_numbers = #tpu.dot_dimension_numbers<[1], [0], [0], [1], [0, 0, 1, 1], [], []>} : vector<48x128xf32>, vector<128x256xf32>, vector<48x256xf32> -> vector<48x256xf32>
    %c0_21 = arith.constant 0 : index
    %c0_22 = arith.constant 0 : index
    %39 = vector.load %arg11[%c0_21, %c0_22] : memref<1x256xf32, #tpu.memory_space<vmem>>, vector<1x256xf32>
    %40 = vector.broadcast %39 : vector<1x256xf32> to vector<48x256xf32>
    %41 = arith.addf %38, %40 : vector<48x256xf32>
    %cst_23 = arith.constant 0.000000e+00 : f32
    %42 = vector.broadcast %cst_23 : f32 to vector<48x256xf32>
    %43 = arith.maximumf %41, %42 : vector<48x256xf32>
    %44 = math.absf %41 : vector<48x256xf32>
    %cst_24 = arith.constant 0.000000e+00 : f32
    %45 = vector.broadcast %cst_24 : f32 to vector<48x256xf32>
    %46 = arith.subf %45, %44 : vector<48x256xf32>
    %47 = math.exp %46 : vector<48x256xf32>
    %cst_25 = arith.constant 1.000000e+00 : f32
    %48 = vector.broadcast %cst_25 : f32 to vector<48x256xf32>
    %49 = arith.addf %48, %47 : vector<48x256xf32>
    %50 = math.log %49 : vector<48x256xf32>
    %51 = arith.addf %43, %50 : vector<48x256xf32>
    %52 = vector.extract_strided_slice %51 {offsets = [0, 0], sizes = [48, 128], strides = [1, 1]} : vector<48x256xf32> to vector<48x128xf32>
    %c0_26 = arith.constant 0 : index
    %c0_27 = arith.constant 0 : index
    %53 = vector.load %arg12[%c0_26, %c0_27] : memref<128x128xf32, #tpu.memory_space<vmem>>, vector<128x128xf32>
    %cst_28 = arith.constant dense<0.000000e+00> : vector<48x128xf32>
    %54 = tpu.matmul %52, %53, %cst_28 {dimension_numbers = #tpu.dot_dimension_numbers<[1], [0], [0], [1], [0, 0, 1, 1], [], []>} : vector<48x128xf32>, vector<128x128xf32>, vector<48x128xf32> -> vector<48x128xf32>
    %c0_29 = arith.constant 0 : index
    %c0_30 = arith.constant 0 : index
    %55 = vector.load %arg13[%c0_29, %c0_30] : memref<1x128xf32, #tpu.memory_space<vmem>>, vector<1x128xf32>
    %56 = vector.broadcast %55 : vector<1x128xf32> to vector<48x128xf32>
    %57 = arith.addf %54, %56 : vector<48x128xf32>
    %58 = vector.extract_strided_slice %51 {offsets = [0, 128], sizes = [48, 128], strides = [1, 1]} : vector<48x256xf32> to vector<48x128xf32>
    %c0_31 = arith.constant 0 : index
    %c0_32 = arith.constant 0 : index
    %59 = vector.load %arg14[%c0_31, %c0_32] : memref<128x128xf32, #tpu.memory_space<vmem>>, vector<128x128xf32>
    %cst_33 = arith.constant dense<0.000000e+00> : vector<48x128xf32>
    %60 = tpu.matmul %58, %59, %cst_33 {dimension_numbers = #tpu.dot_dimension_numbers<[1], [0], [0], [1], [0, 0, 1, 1], [], []>} : vector<48x128xf32>, vector<128x128xf32>, vector<48x128xf32> -> vector<48x128xf32>
    %c0_34 = arith.constant 0 : index
    %c0_35 = arith.constant 0 : index
    %61 = vector.load %arg15[%c0_34, %c0_35] : memref<1x128xf32, #tpu.memory_space<vmem>>, vector<1x128xf32>
    %62 = vector.broadcast %61 : vector<1x128xf32> to vector<48x128xf32>
    %63 = arith.addf %60, %62 : vector<48x128xf32>
    %c0_36 = arith.constant 0 : index
    %c0_37 = arith.constant 0 : index
    %64 = vector.load %arg3[%c0_36, %c0_37] : memref<8x16xf32, #tpu.memory_space<vmem>>, vector<8x16xf32>
    %65 = vector.extract_strided_slice %63 {offsets = [0, 0], sizes = [16, 128], strides = [1, 1]} : vector<48x128xf32> to vector<16x128xf32>
    %cst_38 = arith.constant dense<0.000000e+00> : vector<8x128xf32>
    %66 = tpu.matmul %64, %65, %cst_38 {dimension_numbers = #tpu.dot_dimension_numbers<[1], [0], [0], [1], [0, 0, 1, 1], [], []>} : vector<8x16xf32>, vector<16x128xf32>, vector<8x128xf32> -> vector<8x128xf32>
    %67 = vector.extract_strided_slice %63 {offsets = [16, 0], sizes = [16, 128], strides = [1, 1]} : vector<48x128xf32> to vector<16x128xf32>
    %cst_39 = arith.constant dense<0.000000e+00> : vector<8x128xf32>
    %68 = tpu.matmul %64, %67, %cst_39 {dimension_numbers = #tpu.dot_dimension_numbers<[1], [0], [0], [1], [0, 0, 1, 1], [], []>} : vector<8x16xf32>, vector<16x128xf32>, vector<8x128xf32> -> vector<8x128xf32>
    %69 = vector.extract_strided_slice %63 {offsets = [32, 0], sizes = [16, 128], strides = [1, 1]} : vector<48x128xf32> to vector<16x128xf32>
    %cst_40 = arith.constant dense<0.000000e+00> : vector<8x128xf32>
    %70 = tpu.matmul %64, %69, %cst_40 {dimension_numbers = #tpu.dot_dimension_numbers<[1], [0], [0], [1], [0, 0, 1, 1], [], []>} : vector<8x16xf32>, vector<16x128xf32>, vector<8x128xf32> -> vector<8x128xf32>
    %71 = tpu.concatenate %66, %68, %70 in 1 : vector<8x128xf32>, vector<8x128xf32>, vector<8x128xf32> -> vector<8x384xf32>
    %72 = vector.extract_strided_slice %57 {offsets = [0, 0], sizes = [16, 128], strides = [1, 1]} : vector<48x128xf32> to vector<16x128xf32>
    %73 = vector.extract_strided_slice %57 {offsets = [16, 0], sizes = [16, 128], strides = [1, 1]} : vector<48x128xf32> to vector<16x128xf32>
    %74 = vector.extract_strided_slice %57 {offsets = [32, 0], sizes = [16, 128], strides = [1, 1]} : vector<48x128xf32> to vector<16x128xf32>
    %75 = tpu.concatenate %72, %73, %74 in 1 : vector<16x128xf32>, vector<16x128xf32>, vector<16x128xf32> -> vector<16x384xf32>
    %c0_41 = arith.constant 0 : index
    %c0_42 = arith.constant 0 : index
    %76 = vector.load %arg2[%c0_41, %c0_42] : memref<16x8xf32, #tpu.memory_space<vmem>>, vector<16x8xf32>
    %cst_43 = arith.constant dense<0.000000e+00> : vector<16x384xf32>
    %77 = tpu.matmul %76, %71, %cst_43 {dimension_numbers = #tpu.dot_dimension_numbers<[1], [0], [0], [1], [0, 0, 1, 1], [], []>} : vector<16x8xf32>, vector<8x384xf32>, vector<16x384xf32> -> vector<16x384xf32>
    %78 = arith.addf %75, %77 : vector<16x384xf32>
    %c0_44 = arith.constant 0 : index
    %c0_45 = arith.constant 0 : index
    %79 = vector.load %arg16[%c0_44, %c0_45] : memref<16x384xf32, #tpu.memory_space<vmem>>, vector<16x384xf32>
    tpu.vector_store %arg16[%c0_44, %c0_45], %78 {strides = array<i32>} : memref<16x384xf32, #tpu.memory_space<vmem>>, vector<16x384xf32>,
    return
  }
  func.func @transform_0(%arg0: i32) -> (i32, i32) {
    %c0_i32 = arith.constant 0 : i32
    %c0_i32_0 = arith.constant 0 : i32
    %c0_i32_1 = arith.constant 0 : i32
    return %c0_i32, %c0_i32_0 : i32, i32
  }
  func.func @transform_1(%arg0: i32) -> (i32, i32) {
    %c0_i32 = arith.constant 0 : i32
    %c0_i32_0 = arith.constant 0 : i32
    %c0_i32_1 = arith.constant 0 : i32
    return %c0_i32, %c0_i32_0 : i32, i32
  }
  func.func @transform_2(%arg0: i32) -> (i32, i32) {
    %c0_i32 = arith.constant 0 : i32
    %c0_i32_0 = arith.constant 0 : i32
    %c0_i32_1 = arith.constant 0 : i32
    return %c0_i32, %c0_i32_0 : i32, i32
  }
  func.func @transform_3(%arg0: i32) -> (i32, i32) {
    %c0_i32 = arith.constant 0 : i32
    %c0_i32_0 = arith.constant 0 : i32
    return %arg0, %c0_i32 : i32, i32
  }
  func.func @transform_4(%arg0: i32) -> (i32, i32) {
    %c0_i32 = arith.constant 0 : i32
    %c0_i32_0 = arith.constant 0 : i32
    return %arg0, %c0_i32 : i32, i32
  }
  func.func @transform_5(%arg0: i32) -> (i32, i32) {
    %c0_i32 = arith.constant 0 : i32
    %c0_i32_0 = arith.constant 0 : i32
    %c0_i32_1 = arith.constant 0 : i32
    return %c0_i32, %c0_i32_0 : i32, i32
  }
  func.func @transform_6(%arg0: i32) -> (i32, i32) {
    %c0_i32 = arith.constant 0 : i32
    %c0_i32_0 = arith.constant 0 : i32
    %c0_i32_1 = arith.constant 0 : i32
    return %c0_i32, %c0_i32_0 : i32, i32
  }
  func.func @transform_7(%arg0: i32) -> (i32, i32) {
    %c0_i32 = arith.constant 0 : i32
    %c0_i32_0 = arith.constant 0 : i32
    %c0_i32_1 = arith.constant 0 : i32
    return %c0_i32, %c0_i32_0 : i32, i32
  }
  func.func @transform_8(%arg0: i32) -> (i32, i32) {
    %c0_i32 = arith.constant 0 : i32
    %c0_i32_0 = arith.constant 0 : i32
    %c0_i32_1 = arith.constant 0 : i32
    return %c0_i32, %c0_i32_0 : i32, i32
  }
  func.func @transform_9(%arg0: i32) -> (i32, i32) {
    %c0_i32 = arith.constant 0 : i32
    %c0_i32_0 = arith.constant 0 : i32
    %c0_i32_1 = arith.constant 0 : i32
    return %c0_i32, %c0_i32_0 : i32, i32
  }
  func.func @transform_10(%arg0: i32) -> (i32, i32) {
    %c0_i32 = arith.constant 0 : i32
    %c0_i32_0 = arith.constant 0 : i32
    %c0_i32_1 = arith.constant 0 : i32
    return %c0_i32, %c0_i32_0 : i32, i32
  }
  func.func @transform_11(%arg0: i32) -> (i32, i32) {
    %c0_i32 = arith.constant 0 : i32
    %c0_i32_0 = arith.constant 0 : i32
    %c0_i32_1 = arith.constant 0 : i32
    return %c0_i32, %c0_i32_0 : i32, i32
  }
  func.func @transform_12(%arg0: i32) -> (i32, i32) {
    %c0_i32 = arith.constant 0 : i32
    %c0_i32_0 = arith.constant 0 : i32
    %c0_i32_1 = arith.constant 0 : i32
    return %c0_i32, %c0_i32_0 : i32, i32
  }
  func.func @transform_13(%arg0: i32) -> (i32, i32) {
    %c0_i32 = arith.constant 0 : i32
    %c0_i32_0 = arith.constant 0 : i32
    %c0_i32_1 = arith.constant 0 : i32
    return %c0_i32, %c0_i32_0 : i32, i32
  }
  func.func @transform_14(%arg0: i32) -> (i32, i32) {
    %c0_i32 = arith.constant 0 : i32
    %c0_i32_0 = arith.constant 0 : i32
    %c0_i32_1 = arith.constant 0 : i32
    return %c0_i32, %c0_i32_0 : i32, i32
  }
  func.func @transform_15(%arg0: i32) -> (i32, i32) {
    %c0_i32 = arith.constant 0 : i32
    %c0_i32_0 = arith.constant 0 : i32
    return %arg0, %c0_i32 : i32, i32
  }
}

</mosaic_0001>

<llo_original>
// kernel: tpu_custom_call.1
$region0: #{tpu_custom_call.1}
  #allocation0 [shape = 'u32[]', space=smem, size = 0x4, offset = 0x4, fixed_abs, tag = 'smem constant byte address 0x4 - core index']
  #allocation1 [shape = 'u32[144,128]{1,0:T(1,128)}', space=vmem, size = 0x12000, scoped, tag = 'internal scratch']
  %s0 = inlined_call_operand.vmem [shape: f32[32,8], index: 0, kind: input, shape index: {}]
  %s1 = inlined_call_operand.vmem [shape: f32[16,8], index: 1, kind: input, shape index: {}]
  %s2 = inlined_call_operand.vmem [shape: f32[8,16], index: 2, kind: input, shape index: {}]
  %s3 = inlined_call_operand.vmem [shape: f32[32,16], index: 3, kind: input, shape index: {}]
  %s4 = inlined_call_operand.hbm [shape: f32[16,384], index: 4, kind: input, shape index: {}]
  %s5 = inlined_call_operand.hbm [shape: f32[16,128], index: 5, kind: input, shape index: {}]
  %s6 = inlined_call_operand.hbm [shape: f32[1,128], index: 6, kind: input, shape index: {}]
  %s7 = inlined_call_operand.vmem [shape: f32[128,128], index: 7, kind: input, shape index: {}]
  %s8 = inlined_call_operand.vmem [shape: f32[1,128], index: 8, kind: input, shape index: {}]
  %s9 = inlined_call_operand.hbm [shape: f32[128,256], index: 9, kind: input, shape index: {}]
  %s10 = inlined_call_operand.vmem [shape: f32[1,256], index: 10, kind: input, shape index: {}]
  %s11 = inlined_call_operand.hbm [shape: f32[128,128], index: 11, kind: input, shape index: {}]
  %s12 = inlined_call_operand.vmem [shape: f32[1,128], index: 12, kind: input, shape index: {}]
  %s13 = inlined_call_operand.hbm [shape: f32[128,128], index: 13, kind: input, shape index: {}]
  %s14 = inlined_call_operand.vmem [shape: f32[1,128], index: 14, kind: input, shape index: {}]
  %s15 = inlined_call_operand.hbm [shape: f32[32,384], index: 15, kind: output, shape index: {}]
  %s16 = sld [smem:[#allocation0]]
  $region117: #{tpu_custom_call.1} parent=0
    _
  %s18 = ssub.s32 1, %s16
  %s19 = scalar_select 0, %s18, %s16
  $region1: #{tpu_custom_call.1} parent=0
    #allocation2 [shape = 'u8[24576]{0}', space=vmem, size = 0x6000, scoped, tag = 'input window, operand 4']
    #allocation3 [shape = 's32[2]{0}', space=sflag, size = 0x8, scoped, tag = 'scoped memory for tpu_custom_call.1']
    #allocation4 [shape = 's32[2]{0}', space=sflag, size = 0x8, scoped, tag = 'scoped memory for tpu_custom_call.1']
    #allocation5 [shape = 'u8[8192]{0}', space=vmem, size = 0x2000, scoped, tag = 'input window, operand 5, single buffered']
    #allocation6 [shape = 's32[1]{0}', space=sflag, size = 0x4, scoped, tag = 'scoped memory for tpu_custom_call.1']
    #allocation7 [shape = 'u8[512]{0}', space=vmem, size = 0x400, scoped, tag = 'input window, operand 6, single buffered']
    #allocation8 [shape = 'u8[131072]{0}', space=vmem, size = 0x20000, scoped, tag = 'input window, operand 9, single buffered']
    #allocation9 [shape = 's32[1]{0}', space=sflag, size = 0x4, scoped, tag = 'scoped memory for tpu_custom_call.1']
    #allocation10 [shape = 'u8[65536]{0}', space=vmem, size = 0x10000, scoped, tag = 'input window, operand 11, single buffered']
    #allocation11 [shape = 'u8[65536]{0}', space=vmem, size = 0x10000, scoped, tag = 'input window, operand 13, single buffered']
    #allocation12 [shape = 's32[1]{0}', space=sflag, size = 0x4, scoped, tag = 'scoped memory for tpu_custom_call.1']
    #allocation13 [shape = 'u8[49152]{0}', space=vmem, size = 0xc000, scoped, tag = 'output window, operand 0']
    %20 = vsyncpa [#allocation3], 0
    %s21 = scalar_lea.sflag [#allocation3], 1
    %22 = vsyncpa %s21, 0
    %23 = vsyncpa [#allocation6], 0
    %24 = vsyncpa [#allocation9], 0
    %25 = vsyncpa [#allocation12], 0
    %26 = vsyncpa [#allocation4], 0
    %s27 = scalar_lea.sflag [#allocation4], 1
    %28 = vsyncpa %s27, 0
    loop: start=0, step=1, limit=4
    $region2: #{tpu_custom_call.1} parent=1 // loop_pre_header
      _
    $region3: #{tpu_custom_call.1} parent=1 // loop_header
      %s30 = sphi 0, %s34
      %p31 = scmp.ge.s32.totalorder %s30, 4
      %s38 = sphi 0, %s38
      %s40 = sphi 0, %s38
      %s41 = sphi 0, %s40
      %s55 = sphi 0, %s41
      %s59 = sphi 0, %s59
      %s61 = sphi 0, %s59
      %s62 = sphi 0, %s61
      %s76 = sphi 0, %s62
      %s80 = sphi 0, %s80
      %s82 = sphi 0, %s80
      %s83 = sphi 0, %s82
      %s97 = sphi 0, %s83
      %s103 = sphi 0, %s105
      %s106 = sphi 0, %s103
      %s107 = sphi 0, %s106
      %s123 = sphi 0, %s107
      %s129 = sphi 0, %s131
      %s132 = sphi 0, %s129
      %s133 = sphi 0, %s132
      %s149 = sphi 0, %s133
      %s153 = sphi 0, %s153
      %s155 = sphi 0, %s153
      %s156 = sphi 0, %s155
      %s170 = sphi 0, %s156
      %s174 = sphi 0, %s174
      %s176 = sphi 0, %s174
      %s177 = sphi 0, %s176
      %s191 = sphi 0, %s177
      %s195 = sphi 0, %s195
      %s197 = sphi 0, %s195
      %s198 = sphi 0, %s197
      %s212 = sphi 0, %s198
      %s216 = sphi 0, %s216
      %s218 = sphi 0, %s216
      %s219 = sphi 0, %s218
      %s233 = sphi 0, %s219
      %s237 = sphi 0, %s237
      %s239 = sphi 0, %s237
      %s240 = sphi 0, %s239
      %s254 = sphi 0, %s240
      %s258 = sphi 0, %s258
      %s260 = sphi 0, %s258
      %s261 = sphi 0, %s260
      %s275 = sphi 0, %s261
      %s279 = sphi 0, %s279
      %s281 = sphi 0, %s279
      %s282 = sphi 0, %s281
      %s296 = sphi 0, %s282
      %s300 = sphi 0, %s300
      %s302 = sphi 0, %s300
      %s303 = sphi 0, %s302
      %s317 = sphi 0, %s303
      %s321 = sphi 0, %s321
      %s323 = sphi 0, %s321
      %s324 = sphi 0, %s323
      %s338 = sphi 0, %s324
      %s342 = sphi 0, %s342
      %s344 = sphi 0, %s342
      %s345 = sphi 0, %s344
      %s359 = sphi 0, %s345
      %s365 = sphi 0, %s367
      %s368 = sphi 0, %s365
      %s369 = sphi 0, %s368
      %s385 = sphi 0, %s369
    $region4: #{tpu_custom_call.1} parent=1 // loop_header_branch
      %33 = sbr.rel (%p31) target = $region8
    $region5: #{tpu_custom_call.1} parent=1 // loop_body
      %s35 = ssub.s32 %s30, 1
      %s36 = ssub.s32 %s30, 2
      %s37 = sadd.s32 %s30, 1
      %s39 = sadd.s32 %s38, 1
      %p42 = scmp.eq.s32.totalorder %s30, 1
      %p43 = scmp.ne.s32.totalorder %s38, %s40
      %p44 = scmp.eq.s32.totalorder %s30, 0
      %p45 = por %p43, %p44
      %p46 = scmp.ne.s32.totalorder %s38, %s40
      %p47 = scmp.eq.s32.totalorder %s35, 1
      %p48 = por %p46, %p47
      %p49 = scmp.ne.s32.totalorder %s40, %s41
      %p50 = scmp.eq.s32.totalorder %s35, 0
      %p51 = por %p49, %p50
      %p52 = scmp.ne.s32.totalorder %s40, %s41
      %p53 = scmp.eq.s32.totalorder %s36, 1
      %p54 = por %p52, %p53
      %p56 = scmp.ne.s32.totalorder %s41, %s55
      %p57 = scmp.eq.s32.totalorder %s36, 0
      %p58 = por %p56, %p57
      %s60 = sadd.s32 %s59, 1
      %p63 = scmp.eq.s32.totalorder %s30, 1
      %p64 = scmp.ne.s32.totalorder %s59, %s61
      %p65 = scmp.eq.s32.totalorder %s30, 0
      %p66 = por %p64, %p65
      %p67 = scmp.ne.s32.totalorder %s59, %s61
      %p68 = scmp.eq.s32.totalorder %s35, 1
      %p69 = por %p67, %p68
      %p70 = scmp.ne.s32.totalorder %s61, %s62
      %p71 = scmp.eq.s32.totalorder %s35, 0
      %p72 = por %p70, %p71
      %p73 = scmp.ne.s32.totalorder %s61, %s62
      %p74 = scmp.eq.s32.totalorder %s36, 1
      %p75 = por %p73, %p74
      %p77 = scmp.ne.s32.totalorder %s62, %s76
      %p78 = scmp.eq.s32.totalorder %s36, 0
      %p79 = por %p77, %p78
      %s81 = sadd.s32 %s80, 1
      %p84 = scmp.eq.s32.totalorder %s30, 1
      %p85 = scmp.ne.s32.totalorder %s80, %s82
      %p86 = scmp.eq.s32.totalorder %s30, 0
      %p87 = por %p85, %p86
      %p88 = scmp.ne.s32.totalorder %s80, %s82
      %p89 = scmp.eq.s32.totalorder %s35, 1
      %p90 = por %p88, %p89
      %p91 = scmp.ne.s32.totalorder %s82, %s83
      %p92 = scmp.eq.s32.totalorder %s35, 0
      %p93 = por %p91, %p92
      %p94 = scmp.ne.s32.totalorder %s82, %s83
      %p95 = scmp.eq.s32.totalorder %s36, 1
      %p96 = por %p94, %p95
      %p98 = scmp.ne.s32.totalorder %s83, %s97
      %p99 = scmp.eq.s32.totalorder %s36, 0
      %p100 = por %p98, %p99
      %s101 = ssub.s32 %s30, %s37
      %p102 = scmp.eq.s32.totalorder %s101, 0
      %s104 = sadd.s32 %s103, 1
      %s105 = scalar_select %p102, %s103, %s104
      %p108 = pneg %p102
      %p109 = scmp.eq.s32.totalorder %s30, 1
      %p110 = por %p108, %p109
      %p111 = scmp.ne.s32.totalorder %s103, %s106
      %p112 = scmp.eq.s32.totalorder %s30, 0
      %p113 = por %p111, %p112
      %p114 = scmp.ne.s32.totalorder %s103, %s106
      %p115 = scmp.eq.s32.totalorder %s35, 1
      %p116 = por %p114, %p115
      %p117 = scmp.ne.s32.totalorder %s106, %s107
      %p118 = scmp.eq.s32.totalorder %s35, 0
      %p119 = por %p117, %p118
      %p120 = scmp.ne.s32.totalorder %s106, %s107
      %p121 = scmp.eq.s32.totalorder %s36, 1
      %p122 = por %p120, %p121
      %p124 = scmp.ne.s32.totalorder %s107, %s123
      %p125 = scmp.eq.s32.totalorder %s36, 0
      %p126 = por %p124, %p125
      %s127 = ssub.s32 %s30, %s37
      %p128 = scmp.eq.s32.totalorder %s127, 0
      %s130 = sadd.s32 %s129, 1
      %s131 = scalar_select %p128, %s129, %s130
      %p134 = pneg %p128
      %p135 = scmp.eq.s32.totalorder %s30, 1
      %p136 = por %p134, %p135
      %p137 = scmp.ne.s32.totalorder %s129, %s132
      %p138 = scmp.eq.s32.totalorder %s30, 0
      %p139 = por %p137, %p138
      %p140 = scmp.ne.s32.totalorder %s129, %s132
      %p141 = scmp.eq.s32.totalorder %s35, 1
      %p142 = por %p140, %p141
      %p143 = scmp.ne.s32.totalorder %s132, %s133
      %p144 = scmp.eq.s32.totalorder %s35, 0
      %p145 = por %p143, %p144
      %p146 = scmp.ne.s32.totalorder %s132, %s133
      %p147 = scmp.eq.s32.totalorder %s36, 1
      %p148 = por %p146, %p147
      %p150 = scmp.ne.s32.totalorder %s133, %s149
      %p151 = scmp.eq.s32.totalorder %s36, 0
      %p152 = por %p150, %p151
      %s154 = sadd.s32 %s153, 1
      %p157 = scmp.eq.s32.totalorder %s30, 1
      %p158 = scmp.ne.s32.totalorder %s153, %s155
      %p159 = scmp.eq.s32.totalorder %s30, 0
      %p160 = por %p158, %p159
      %p161 = scmp.ne.s32.totalorder %s153, %s155
      %p162 = scmp.eq.s32.totalorder %s35, 1
      %p163 = por %p161, %p162
      %p164 = scmp.ne.s32.totalorder %s155, %s156
      %p165 = scmp.eq.s32.totalorder %s35, 0
      %p166 = por %p164, %p165
      %p167 = scmp.ne.s32.totalorder %s155, %s156
      %p168 = scmp.eq.s32.totalorder %s36, 1
      %p169 = por %p167, %p168
      %p171 = scmp.ne.s32.totalorder %s156, %s170
      %p172 = scmp.eq.s32.totalorder %s36, 0
      %p173 = por %p171, %p172
      %s175 = sadd.s32 %s174, 1
      %p178 = scmp.eq.s32.totalorder %s30, 1
      %p179 = scmp.ne.s32.totalorder %s174, %s176
      %p180 = scmp.eq.s32.totalorder %s30, 0
      %p181 = por %p179, %p180
      %p182 = scmp.ne.s32.totalorder %s174, %s176
      %p183 = scmp.eq.s32.totalorder %s35, 1
      %p184 = por %p182, %p183
      %p185 = scmp.ne.s32.totalorder %s176, %s177
      %p186 = scmp.eq.s32.totalorder %s35, 0
      %p187 = por %p185, %p186
      %p188 = scmp.ne.s32.totalorder %s176, %s177
      %p189 = scmp.eq.s32.totalorder %s36, 1
      %p190 = por %p188, %p189
      %p192 = scmp.ne.s32.totalorder %s177, %s191
      %p193 = scmp.eq.s32.totalorder %s36, 0
      %p194 = por %p192, %p193
      %s196 = sadd.s32 %s195, 1
      %p199 = scmp.eq.s32.totalorder %s30, 1
      %p200 = scmp.ne.s32.totalorder %s195, %s197
      %p201 = scmp.eq.s32.totalorder %s30, 0
      %p202 = por %p200, %p201
      %p203 = scmp.ne.s32.totalorder %s195, %s197
      %p204 = scmp.eq.s32.totalorder %s35, 1
      %p205 = por %p203, %p204
      %p206 = scmp.ne.s32.totalorder %s197, %s198
      %p207 = scmp.eq.s32.totalorder %s35, 0
      %p208 = por %p206, %p207
      %p209 = scmp.ne.s32.totalorder %s197, %s198
      %p210 = scmp.eq.s32.totalorder %s36, 1
      %p211 = por %p209, %p210
      %p213 = scmp.ne.s32.totalorder %s198, %s212
      %p214 = scmp.eq.s32.totalorder %s36, 0
      %p215 = por %p213, %p214
      %s217 = sadd.s32 %s216, 1
      %p220 = scmp.eq.s32.totalorder %s30, 1
      %p221 = scmp.ne.s32.totalorder %s216, %s218
      %p222 = scmp.eq.s32.totalorder %s30, 0
      %p223 = por %p221, %p222
      %p224 = scmp.ne.s32.totalorder %s216, %s218
      %p225 = scmp.eq.s32.totalorder %s35, 1
      %p226 = por %p224, %p225
      %p227 = scmp.ne.s32.totalorder %s218, %s219
      %p228 = scmp.eq.s32.totalorder %s35, 0
      %p229 = por %p227, %p228
      %p230 = scmp.ne.s32.totalorder %s218, %s219
      %p231 = scmp.eq.s32.totalorder %s36, 1
      %p232 = por %p230, %p231
      %p234 = scmp.ne.s32.totalorder %s219, %s233
      %p235 = scmp.eq.s32.totalorder %s36, 0
      %p236 = por %p234, %p235
      %s238 = sadd.s32 %s237, 1
      %p241 = scmp.eq.s32.totalorder %s30, 1
      %p242 = scmp.ne.s32.totalorder %s237, %s239
      %p243 = scmp.eq.s32.totalorder %s30, 0
      %p244 = por %p242, %p243
      %p245 = scmp.ne.s32.totalorder %s237, %s239
      %p246 = scmp.eq.s32.totalorder %s35, 1
      %p247 = por %p245, %p246
      %p248 = scmp.ne.s32.totalorder %s239, %s240
      %p249 = scmp.eq.s32.totalorder %s35, 0
      %p250 = por %p248, %p249
      %p251 = scmp.ne.s32.totalorder %s239, %s240
      %p252 = scmp.eq.s32.totalorder %s36, 1
      %p253 = por %p251, %p252
      %p255 = scmp.ne.s32.totalorder %s240, %s254
      %p256 = scmp.eq.s32.totalorder %s36, 0
      %p257 = por %p255, %p256
      %s259 = sadd.s32 %s258, 1
      %p262 = scmp.eq.s32.totalorder %s30, 1
      %p263 = scmp.ne.s32.totalorder %s258, %s260
      %p264 = scmp.eq.s32.totalorder %s30, 0
      %p265 = por %p263, %p264
      %p266 = scmp.ne.s32.totalorder %s258, %s260
      %p267 = scmp.eq.s32.totalorder %s35, 1
      %p268 = por %p266, %p267
      %p269 = scmp.ne.s32.totalorder %s260, %s261
      %p270 = scmp.eq.s32.totalorder %s35, 0
      %p271 = por %p269, %p270
      %p272 = scmp.ne.s32.totalorder %s260, %s261
      %p273 = scmp.eq.s32.totalorder %s36, 1
      %p274 = por %p272, %p273
      %p276 = scmp.ne.s32.totalorder %s261, %s275
      %p277 = scmp.eq.s32.totalorder %s36, 0
      %p278 = por %p276, %p277
      %s280 = sadd.s32 %s279, 1
      %p283 = scmp.eq.s32.totalorder %s30, 1
      %p284 = scmp.ne.s32.totalorder %s279, %s281
      %p285 = scmp.eq.s32.totalorder %s30, 0
      %p286 = por %p284, %p285
      %p287 = scmp.ne.s32.totalorder %s279, %s281
      %p288 = scmp.eq.s32.totalorder %s35, 1
      %p289 = por %p287, %p288
      %p290 = scmp.ne.s32.totalorder %s281, %s282
      %p291 = scmp.eq.s32.totalorder %s35, 0
      %p292 = por %p290, %p291
      %p293 = scmp.ne.s32.totalorder %s281, %s282
      %p294 = scmp.eq.s32.totalorder %s36, 1
      %p295 = por %p293, %p294
      %p297 = scmp.ne.s32.totalorder %s282, %s296
      %p298 = scmp.eq.s32.totalorder %s36, 0
      %p299 = por %p297, %p298
      %s301 = sadd.s32 %s300, 1
      %p304 = scmp.eq.s32.totalorder %s30, 1
      %p305 = scmp.ne.s32.totalorder %s300, %s302
      %p306 = scmp.eq.s32.totalorder %s30, 0
      %p307 = por %p305, %p306
      %p308 = scmp.ne.s32.totalorder %s300, %s302
      %p309 = scmp.eq.s32.totalorder %s35, 1
      %p310 = por %p308, %p309
      %p311 = scmp.ne.s32.totalorder %s302, %s303
      %p312 = scmp.eq.s32.totalorder %s35, 0
      %p313 = por %p311, %p312
      %p314 = scmp.ne.s32.totalorder %s302, %s303
      %p315 = scmp.eq.s32.totalorder %s36, 1
      %p316 = por %p314, %p315
      %p318 = scmp.ne.s32.totalorder %s303, %s317
      %p319 = scmp.eq.s32.totalorder %s36, 0
      %p320 = por %p318, %p319
      %s322 = sadd.s32 %s321, 1
      %p325 = scmp.eq.s32.totalorder %s30, 1
      %p326 = scmp.ne.s32.totalorder %s321, %s323
      %p327 = scmp.eq.s32.totalorder %s30, 0
      %p328 = por %p326, %p327
      %p329 = scmp.ne.s32.totalorder %s321, %s323
      %p330 = scmp.eq.s32.totalorder %s35, 1
      %p331 = por %p329, %p330
      %p332 = scmp.ne.s32.totalorder %s323, %s324
      %p333 = scmp.eq.s32.totalorder %s35, 0
      %p334 = por %p332, %p333
      %p335 = scmp.ne.s32.totalorder %s323, %s324
      %p336 = scmp.eq.s32.totalorder %s36, 1
      %p337 = por %p335, %p336
      %p339 = scmp.ne.s32.totalorder %s324, %s338
      %p340 = scmp.eq.s32.totalorder %s36, 0
      %p341 = por %p339, %p340
      %s343 = sadd.s32 %s342, 1
      %p346 = scmp.eq.s32.totalorder %s30, 1
      %p347 = scmp.ne.s32.totalorder %s342, %s344
      %p348 = scmp.eq.s32.totalorder %s30, 0
      %p349 = por %p347, %p348
      %p350 = scmp.ne.s32.totalorder %s342, %s344
      %p351 = scmp.eq.s32.totalorder %s35, 1
      %p352 = por %p350, %p351
      %p353 = scmp.ne.s32.totalorder %s344, %s345
      %p354 = scmp.eq.s32.totalorder %s35, 0
      %p355 = por %p353, %p354
      %p356 = scmp.ne.s32.totalorder %s344, %s345
      %p357 = scmp.eq.s32.totalorder %s36, 1
      %p358 = por %p356, %p357
      %p360 = scmp.ne.s32.totalorder %s345, %s359
      %p361 = scmp.eq.s32.totalorder %s36, 0
      %p362 = por %p360, %p361
      %s363 = ssub.s32 %s30, %s37
      %p364 = scmp.eq.s32.totalorder %s363, 0
      %s366 = sadd.s32 %s365, 1
      %s367 = scalar_select %p364, %s365, %s366
      %p370 = pneg %p364
      %p371 = scmp.eq.s32.totalorder %s30, 1
      %p372 = por %p370, %p371
      %p373 = scmp.ne.s32.totalorder %s365, %s368
      %p374 = scmp.eq.s32.totalorder %s30, 0
      %p375 = por %p373, %p374
      %p376 = scmp.ne.s32.totalorder %s365, %s368
      %p377 = scmp.eq.s32.totalorder %s35, 1
      %p378 = por %p376, %p377
      %p379 = scmp.ne.s32.totalorder %s368, %s369
      %p380 = scmp.eq.s32.totalorder %s35, 0
      %p381 = por %p379, %p380
      %p382 = scmp.ne.s32.totalorder %s368, %s369
      %p383 = scmp.eq.s32.totalorder %s36, 1
      %p384 = por %p382, %p383
      %p386 = scmp.ne.s32.totalorder %s369, %s385
      %p387 = scmp.eq.s32.totalorder %s36, 0
      %p388 = por %p386, %p387
      %p389 = scmp.le.s32.totalorder 1, %s30
      %p390 = scmp.lt.s32.totalorder %s30, 3
      %p391 = pnand %p389, %p390
      %p392 = pneg %p391
      // Predicated region
      $region9: #{tpu_custom_call.1} parent=5 // pred_check
        _
      $region10: #{tpu_custom_call.1} parent=5 // pred_check_branch
        %394 = sbr.rel (%p391) target = $region12
      $region11: #{tpu_custom_call.1} parent=5 // pred_region
        %s395 = ssub.s32 %s30, 1
        // Predicated region
        $region13: #{tpu_custom_call.1} parent=11 // pred_check
          %p396 = pneg %p51
        $region14: #{tpu_custom_call.1} parent=11 // pred_check_branch
          %398 = sbr.rel (%p396) target = $region16
        $region15: #{tpu_custom_call.1} parent=11 // pred_region
          _
        $region16: #{tpu_custom_call.1} parent=11 // pred_fallthru
          _
        // Predicated region
        $region17: #{tpu_custom_call.1} parent=11 // pred_check
          %p399 = pneg %p72
        $region18: #{tpu_custom_call.1} parent=11 // pred_check_branch
          %401 = sbr.rel (%p399) target = $region20
        $region19: #{tpu_custom_call.1} parent=11 // pred_region
          _
        $region20: #{tpu_custom_call.1} parent=11 // pred_fallthru
          _
        // Predicated region
        $region21: #{tpu_custom_call.1} parent=11 // pred_check
          %p402 = pneg %p93
        $region22: #{tpu_custom_call.1} parent=11 // pred_check_branch
          %404 = sbr.rel (%p402) target = $region24
        $region23: #{tpu_custom_call.1} parent=11 // pred_region
          _
        $region24: #{tpu_custom_call.1} parent=11 // pred_fallthru
          _
        // Predicated region
        $region25: #{tpu_custom_call.1} parent=11 // pred_check
          %p405 = pneg %p166
        $region26: #{tpu_custom_call.1} parent=11 // pred_check_branch
          %407 = sbr.rel (%p405) target = $region28
        $region27: #{tpu_custom_call.1} parent=11 // pred_region
          %s409 = ssub.s32 256, 256
          %410 = vsyncadd [#allocation6], %s409
          %s411 = sshll.u32 [#allocation5], 4
          %s412 = int_to_ptr.vmem [resolvable:$true] %s411
          %417 = dma.hbm_to_vmem [thread:$0]  %s5, 256, %s412, [#allocation6], 128, 128, 8
        $region28: #{tpu_custom_call.1} parent=11 // pred_fallthru
          _
        // Predicated region
        $region29: #{tpu_custom_call.1} parent=11 // pred_check
          %p418 = pneg %p187
        $region30: #{tpu_custom_call.1} parent=11 // pred_check_branch
          %420 = sbr.rel (%p418) target = $region32
        $region31: #{tpu_custom_call.1} parent=11 // pred_region
          %s422 = ssub.s32 16, 16
          %423 = vsyncadd [#allocation6], %s422
          %s425 = sshll.u32 [#allocation7], 4
          %s426 = int_to_ptr.vmem [resolvable:$true] %s425
          %428 = dma.hbm_to_vmem [thread:$0]  %s6, 16, %s426, [#allocation6]
        $region32: #{tpu_custom_call.1} parent=11 // pred_fallthru
          _
        // Predicated region
        $region33: #{tpu_custom_call.1} parent=11 // pred_check
          %p429 = pneg %p208
        $region34: #{tpu_custom_call.1} parent=11 // pred_check_branch
          %431 = sbr.rel (%p429) target = $region36
        $region35: #{tpu_custom_call.1} parent=11 // pred_region
          _
        $region36: #{tpu_custom_call.1} parent=11 // pred_fallthru
          _
        // Predicated region
        $region37: #{tpu_custom_call.1} parent=11 // pred_check
          %p432 = pneg %p229
        $region38: #{tpu_custom_call.1} parent=11 // pred_check_branch
          %434 = sbr.rel (%p432) target = $region40
        $region39: #{tpu_custom_call.1} parent=11 // pred_region
          _
        $region40: #{tpu_custom_call.1} parent=11 // pred_fallthru
          _
        // Predicated region
        $region41: #{tpu_custom_call.1} parent=11 // pred_check
          %p435 = pneg %p250
        $region42: #{tpu_custom_call.1} parent=11 // pred_check_branch
          %437 = sbr.rel (%p435) target = $region44
        $region43: #{tpu_custom_call.1} parent=11 // pred_region
          %s439 = ssub.s32 4096, 4096
          %440 = vsyncadd [#allocation9], %s439
          %s441 = sshll.u32 [#allocation8], 4
          %s442 = int_to_ptr.vmem [resolvable:$true] %s441
          %447 = dma.hbm_to_vmem [thread:$0]  %s9, 4096, %s442, [#allocation9], 256, 256, 16
        $region44: #{tpu_custom_call.1} parent=11 // pred_fallthru
          _
        // Predicated region
        $region45: #{tpu_custom_call.1} parent=11 // pred_check
          %p448 = pneg %p271
        $region46: #{tpu_custom_call.1} parent=11 // pred_check_branch
          %450 = sbr.rel (%p448) target = $region48
        $region47: #{tpu_custom_call.1} parent=11 // pred_region
          _
        $region48: #{tpu_custom_call.1} parent=11 // pred_fallthru
          _
        // Predicated region
        $region49: #{tpu_custom_call.1} parent=11 // pred_check
          %p451 = pneg %p292
        $region50: #{tpu_custom_call.1} parent=11 // pred_check_branch
          %453 = sbr.rel (%p451) target = $region52
        $region51: #{tpu_custom_call.1} parent=11 // pred_region
          %s455 = ssub.s32 2048, 2048
          %456 = vsyncadd [#allocation9], %s455
          %s457 = sshll.u32 [#allocation10], 4
          %s458 = int_to_ptr.vmem [resolvable:$true] %s457
          %463 = dma.hbm_to_vmem [thread:$0]  %s11, 2048, %s458, [#allocation9], 128, 128, 8
        $region52: #{tpu_custom_call.1} parent=11 // pred_fallthru
          _
        // Predicated region
        $region53: #{tpu_custom_call.1} parent=11 // pred_check
          %p464 = pneg %p313
        $region54: #{tpu_custom_call.1} parent=11 // pred_check_branch
          %466 = sbr.rel (%p464) target = $region56
        $region55: #{tpu_custom_call.1} parent=11 // pred_region
          _
        $region56: #{tpu_custom_call.1} parent=11 // pred_fallthru
          _
        // Predicated region
        $region57: #{tpu_custom_call.1} parent=11 // pred_check
          %p467 = pneg %p334
        $region58: #{tpu_custom_call.1} parent=11 // pred_check_branch
          %469 = sbr.rel (%p467) target = $region60
        $region59: #{tpu_custom_call.1} parent=11 // pred_region
          %s471 = ssub.s32 2048, 2048
          %472 = vsyncadd [#allocation12], %s471
          %s473 = sshll.u32 [#allocation11], 4
          %s474 = int_to_ptr.vmem [resolvable:$true] %s473
          %479 = dma.hbm_to_vmem [thread:$0]  %s13, 2048, %s474, [#allocation12], 128, 128, 8
        $region60: #{tpu_custom_call.1} parent=11 // pred_fallthru
          _
        // Predicated region
        $region61: #{tpu_custom_call.1} parent=11 // pred_check
          %p480 = pneg %p355
        $region62: #{tpu_custom_call.1} parent=11 // pred_check_branch
          %482 = sbr.rel (%p480) target = $region64
        $region63: #{tpu_custom_call.1} parent=11 // pred_region
          _
        $region64: #{tpu_custom_call.1} parent=11 // pred_fallthru
          _
      $region12: #{tpu_custom_call.1} parent=5 // pred_fallthru
        _
      %p483 = scmp.lt.s32.totalorder %s30, 2
      // Predicated region
      $region65: #{tpu_custom_call.1} parent=5 // pred_check
        %p484 = pneg %p483
      $region66: #{tpu_custom_call.1} parent=5 // pred_check_branch
        %486 = sbr.rel (%p484) target = $region68
      $region67: #{tpu_custom_call.1} parent=5 // pred_region
        // Predicated region
        $region69: #{tpu_custom_call.1} parent=67 // pred_check
          %p487 = pneg %p113
        $region70: #{tpu_custom_call.1} parent=67 // pred_check_branch
          %489 = sbr.rel (%p487) target = $region72
        $region71: #{tpu_custom_call.1} parent=67 // pred_region
          %s490 = smul.u32 2, %s30
          %p491 = scmp.lt.s32.totalorder %s490, 3
          %s492 = scalar_select %p491, %s490, 3
          %s493 = smul.addr %s492, 8
          %s494 = scalar_lea.vmem %s3, %s493
          %s495 = smul.u32 2, %s30
        $region72: #{tpu_custom_call.1} parent=67 // pred_fallthru
          _
        // Predicated region
        $region73: #{tpu_custom_call.1} parent=67 // pred_check
          %p496 = pneg %p139
        $region74: #{tpu_custom_call.1} parent=67 // pred_check_branch
          %498 = sbr.rel (%p496) target = $region76
        $region75: #{tpu_custom_call.1} parent=67 // pred_region
          %s499 = sand.u32 %s129, 1
          %s500 = scalar_lea.sflag [#allocation3], %s499
          %s501 = sand.u32 %s129, 1
          %s502 = smul.addr %s501, 24
          %s503 = scalar_lea.vmem [#allocation2], %s502
          %s505 = ssub.s32 384, 384
          %506 = vsyncadd %s500, %s505
          %s507 = smul.addr %s30, 3
          %s508 = smul.addr %s507, 128
          %s509 = scalar_lea.hbm %s4, %s508
          %s511 = sshll.u32 %s503, 4
          %s512 = int_to_ptr.vmem [resolvable:$true] %s511
          %514 = dma.hbm_to_vmem [thread:$0]  %s509, 384, %s512, %s500
        $region76: #{tpu_custom_call.1} parent=67 // pred_fallthru
          _
      $region68: #{tpu_custom_call.1} parent=5 // pred_fallthru
        _
      %p515 = scmp.le.s32.totalorder 1, %s30
      %p516 = scmp.lt.s32.totalorder %s30, 3
      %p517 = pnand %p515, %p516
      %p518 = pneg %p517
      // Predicated region
      $region77: #{tpu_custom_call.1} parent=5 // pred_check
        _
      $region78: #{tpu_custom_call.1} parent=5 // pred_check_branch
        %520 = sbr.rel (%p517) target = $region80
      $region79: #{tpu_custom_call.1} parent=5 // pred_region
        %s521 = ssub.s32 %s30, 1
        %s522 = sand.u32 %s132, 1
        %s523 = scalar_lea.sflag [#allocation3], %s522
        %s524 = sand.u32 %s132, 1
        %s525 = smul.addr %s524, 24
        %s526 = scalar_lea.vmem [#allocation2], %s525
        // Predicated region
        $region81: #{tpu_custom_call.1} parent=79 // pred_check
          %p527 = pneg %p145
        $region82: #{tpu_custom_call.1} parent=79 // pred_check_branch
          %529 = sbr.rel (%p527) target = $region84
        $region83: #{tpu_custom_call.1} parent=79 // pred_region
          %530 = dma.done %s523, 384
        $region84: #{tpu_custom_call.1} parent=79 // pred_fallthru
          _
        // Predicated region
        $region85: #{tpu_custom_call.1} parent=79 // pred_check
          %p531 = pneg %p166
        $region86: #{tpu_custom_call.1} parent=79 // pred_check_branch
          %533 = sbr.rel (%p531) target = $region88
        $region87: #{tpu_custom_call.1} parent=79 // pred_region
          %534 = dma.done [#allocation6], 256
        $region88: #{tpu_custom_call.1} parent=79 // pred_fallthru
          _
        // Predicated region
        $region89: #{tpu_custom_call.1} parent=79 // pred_check
          %p535 = pneg %p187
        $region90: #{tpu_custom_call.1} parent=79 // pred_check_branch
          %537 = sbr.rel (%p535) target = $region92
        $region91: #{tpu_custom_call.1} parent=79 // pred_region
          %538 = dma.done [#allocation6], 16
        $region92: #{tpu_custom_call.1} parent=79 // pred_fallthru
          _
        // Predicated region
        $region93: #{tpu_custom_call.1} parent=79 // pred_check
          %p539 = pneg %p250
        $region94: #{tpu_custom_call.1} parent=79 // pred_check_branch
          %541 = sbr.rel (%p539) target = $region96
        $region95: #{tpu_custom_call.1} parent=79 // pred_region
          %542 = dma.done [#allocation9], 4096
        $region96: #{tpu_custom_call.1} parent=79 // pred_fallthru
          _
        // Predicated region
        $region97: #{tpu_custom_call.1} parent=79 // pred_check
          %p543 = pneg %p292
        $region98: #{tpu_custom_call.1} parent=79 // pred_check_branch
          %545 = sbr.rel (%p543) target = $region100
        $region99: #{tpu_custom_call.1} parent=79 // pred_region
          %546 = dma.done [#allocation9], 2048
        $region100: #{tpu_custom_call.1} parent=79 // pred_fallthru
          _
        // Predicated region
        $region101: #{tpu_custom_call.1} parent=79 // pred_check
          %p547 = pneg %p334
        $region102: #{tpu_custom_call.1} parent=79 // pred_check_branch
          %549 = sbr.rel (%p547) target = $region104
        $region103: #{tpu_custom_call.1} parent=79 // pred_region
          %550 = dma.done [#allocation12], 2048
        $region104: #{tpu_custom_call.1} parent=79 // pred_fallthru
          _
        %p551 = pneg %p51
        %p552 = pneg %p48
        %p553 = pneg %p72
        %p554 = pneg %p69
        %p555 = pneg %p93
        %p556 = pneg %p90
        %s557 = smul.u32 2, %s35
        %p558 = scmp.lt.s32.totalorder %s557, 3
        %s559 = scalar_select %p558, %s557, 3
        %s560 = smul.addr %s559, 8
        %s561 = scalar_lea.vmem %s3, %s560
        %p562 = pneg %p119
        %p563 = pneg %p116
        %s564 = sand.u32 %s132, 1
        %s565 = scalar_lea.sflag [#allocation3], %s564
        %s566 = sand.u32 %s132, 1
        %s567 = smul.addr %s566, 24
        %s568 = scalar_lea.vmem [#allocation2], %s567
        %p569 = pneg %p145
        %p570 = pneg %p142
        %p571 = pneg %p166
        %p572 = pneg %p163
        %p573 = pneg %p187
        %p574 = pneg %p184
        %p575 = pneg %p208
        %p576 = pneg %p205
        %p577 = pneg %p229
        %p578 = pneg %p226
        %p579 = pneg %p250
        %p580 = pneg %p247
        %p581 = pneg %p271
        %p582 = pneg %p268
        %p583 = pneg %p292
        %p584 = pneg %p289
        %p585 = pneg %p313
        %p586 = pneg %p310
        %p587 = pneg %p334
        %p588 = pneg %p331
        %p589 = pneg %p355
        %p590 = pneg %p352
        %p591 = pneg %p381
        %p592 = pneg %p378
        %s593 = sand.u32 %s368, 1
        %s594 = scalar_lea.sflag [#allocation4], %s593
        %s595 = sand.u32 %s368, 1
        %s596 = smul.addr %s595, 48
        %s597 = scalar_lea.vmem [#allocation13], %s596
        %s598 = smul.u32 2, %s35
        %p599 = scmp.lt.s32.totalorder %s598, 3
        %s600 = scalar_select %p599, %s598, 3
        %s601 = smul.addr %s600, 8
        %s602 = scalar_lea.vmem %s3, %s601
        %s603 = smul.u32 2, %s35
        %s604 = smul.u32 2, %s35
        %v605 = vld [vmem:[%s602] sm:$0xff]
        %v606 = vld [vmem:[%s602 + $0x8] sm:$0xff]
        %v607 = vld [vmem:[#allocation5] sm:$0xff]
        %v608 = vld [vmem:[#allocation5 + $0x8] sm:$0xff]
        %v609 = vld [vmem:[#allocation7] sm:$0x1]
        %v611 = vlaneseq
        %v612 = vshrl.u32 %v611, 7
        %v613 = vsub.s32 0, %v612
        %v614 = vrot.slane %v609, %v613
        %vm616 = vcmask 130048
        %v618 = vsel %vm616, %v605, 0
        %v621 = vsel %vm616, %v606, 0
        %623 = vmatprep.subr.mxu0 0.0
        %624 = vmatpush1.msra.mxu0 %v607
        %625 = vmatprep.subr.mxu0 0.0
        %626 = vmatpush1.msra.mxu0 %v608
        %627 = vmatprep.subr.mxu0 0.0
        %628 = vmatpush1.msra.mxu0 0.0
        %629 = vmatprep.subr.mxu0 0.0
        %630 = vmatpush1.msra.mxu0 0.0
        %631 = vmatprep.subr.mxu0 0.0
        %632 = vmatpush1.msra.mxu0 0.0
        %633 = vmatprep.subr.mxu0 0.0
        %634 = vmatpush1.msra.mxu0 0.0
        %635 = vmatprep.subr.mxu0 0.0
        %636 = vmatpush1.msra.mxu0 0.0
        %637 = vmatprep.subr.mxu0 0.0
        %638 = vmatpush1.msra.mxu0 0.0
        %639 = vmatprep.subr.mxu0 0.0
        %640 = vmatpush1.msra.mxu0 0.0
        %641 = vmatprep.subr.mxu0 0.0
        %642 = vmatpush1.msra.mxu0 0.0
        %643 = vmatprep.subr.mxu0 0.0
        %644 = vmatpush1.msra.mxu0 0.0
        %645 = vmatprep.subr.mxu0 0.0
        %646 = vmatpush1.msra.mxu0 0.0
        %647 = vmatprep.subr.mxu0 0.0
        %648 = vmatpush1.msra.mxu0 0.0
        %649 = vmatprep.subr.mxu0 0.0
        %650 = vmatpush1.msra.mxu0 0.0
        %651 = vmatprep.subr.mxu0 0.0
        %652 = vmatpush1.msra.mxu0 0.0
        %653 = vmatprep.subr.mxu0 0.0
        %654 = vmatpush1.msra.mxu0 0.0
        %655 = vmatprep.subr.mxu0 0.0
        %656 = vmatpush1.msra.mxu0 0.0
        %657 = vmatprep.subr.mxu0 0.0
        %658 = vmatpush1.msra.mxu0 0.0
        %659 = vmatprep.subr.mxu0 0.0
        %660 = vmatpush1.msra.mxu0 0.0
        %661 = vmatprep.subr.mxu0 0.0
        %662 = vmatpush1.msra.mxu0 0.0
        %663 = vmatprep.subr.mxu0 0.0
        %664 = vmatpush1.msra.mxu0 0.0
        %665 = vmatprep.subr.mxu0 0.0
        %666 = vmatpush1.msra.mxu0 0.0
        %667 = vmatprep.subr.mxu0 0.0
        %668 = vmatpush1.msra.mxu0 0.0
        %669 = vmatprep.subr.mxu0 0.0
        %670 = vmatpush1.msra.mxu0 0.0
        %671 = vmatprep.subr.mxu0 0.0
        %672 = vmatpush1.msra.mxu0 0.0
        %673 = vmatprep.subr.mxu0 0.0
        %674 = vmatpush1.msra.mxu0 0.0
        %675 = vmatprep.subr.mxu0 0.0
        %676 = vmatpush1.msra.mxu0 0.0
        %677 = vmatprep.subr.mxu0 0.0
        %678 = vmatpush1.msra.mxu0 0.0
        %679 = vmatprep.subr.mxu0 0.0
        %680 = vmatpush1.msra.mxu0 0.0
        %681 = vmatprep.subr.mxu0 0.0
        %682 = vmatpush1.msra.mxu0 0.0
        %683 = vmatprep.subr.mxu0 0.0
        %684 = vmatpush1.msra.mxu0 0.0
        %685 = vmatprep.subr.mxu0 0.0
        %686 = vmatpush1.msra.mxu0 0.0
        %687 = vmatprep.mubr.f32.mxu0 0.0
        %688 = vmatmul.mubr.f32.gmra.mrb[0].mxu0 %v618
        %v689 = vpop.f32.mrb[0].mxu0
        %v690 = vadd.f32 %v614, %v689
        %v691 = vpop.f32.mrb[0].mxu0
        %692 = vmatprep.mubr.f32.mxu0 0.0
        %693 = vmatmul.mubr.f32.gmra.mrb[0].mxu0 %v621
        %v694 = vpop.f32.mrb[0].mxu0
        %v695 = vadd.f32 %v614, %v694
        %v696 = vpop.f32.mrb[0].mxu0
        %697 = vdwg.mxu0
        %v698 = vmax.f32 %v690, 0.0
        %v699 = vmax.f32 %v695, 0.0
        %v700 = vand.u32 2147483647, %v690
        %v701 = vand.u32 2147483647, %v695
        %v702 = vsub.f32 0.0, %v700
        %v703 = vsub.f32 0.0, %v701
        %v704 = vmul.f32 %v702, 1.442695
        %v705 = vpow.pop %v704
        %v706 = vmul.f32 %v703, 1.442695
        %v707 = vpow.pop %v706
        %v708 = vadd.f32 %v705, 1.0
        %v709 = vadd.f32 %v707, 1.0
        %v710 = vlog2.pop %v708
        %v711 = vmul.f32 %v710, 0.6931472
        %v712 = vlog2.pop %v709
        %v713 = vmul.f32 %v712, 0.6931472
        %v714 = vadd.f32 %v698, %v711
        %v715 = vadd.f32 %v699, %v713
        %v716 = vld [vmem:[%s7] sm:$0xff]
        %v717 = vld [vmem:[%s7 + $0x8] sm:$0xff]
        %v718 = vld [vmem:[%s7 + $0x10] sm:$0xff]
        %v719 = vld [vmem:[%s7 + $0x18] sm:$0xff]
        %v720 = vld [vmem:[%s7 + $0x20] sm:$0xff]
        %v721 = vld [vmem:[%s7 + $0x28] sm:$0xff]
        %v722 = vld [vmem:[%s7 + $0x30] sm:$0xff]
        %v723 = vld [vmem:[%s7 + $0x38] sm:$0xff]
        %v724 = vld [vmem:[%s7 + $0x40] sm:$0xff]
        %v725 = vld [vmem:[%s7 + $0x48] sm:$0xff]
        %v726 = vld [vmem:[%s7 + $0x50] sm:$0xff]
        %v727 = vld [vmem:[%s7 + $0x58] sm:$0xff]
        %v728 = vld [vmem:[%s7 + $0x60] sm:$0xff]
        %v729 = vld [vmem:[%s7 + $0x68] sm:$0xff]
        %v730 = vld [vmem:[%s7 + $0x70] sm:$0xff]
        %v731 = vld [vmem:[%s7 + $0x78] sm:$0xff]
        %v732 = vld [vmem:[%s8] sm:$0x1]
        %v734 = vlaneseq
        %v735 = vshrl.u32 %v734, 7
        %v736 = vsub.s32 0, %v735
        %v737 = vrot.slane %v732, %v736
        %739 = vmatprep.subr.mxu0 0.0
        %740 = vmatpush1.msra.mxu0 %v716
        %741 = vmatprep.subr.mxu0 0.0
        %742 = vmatpush1.msra.mxu0 %v717
        %743 = vmatprep.subr.mxu0 0.0
        %744 = vmatpush1.msra.mxu0 %v718
        %745 = vmatprep.subr.mxu0 0.0
        %746 = vmatpush1.msra.mxu0 %v719
        %747 = vmatprep.subr.mxu0 0.0
        %748 = vmatpush1.msra.mxu0 %v720
        %749 = vmatprep.subr.mxu0 0.0
        %750 = vmatpush1.msra.mxu0 %v721
        %751 = vmatprep.subr.mxu0 0.0
        %752 = vmatpush1.msra.mxu0 %v722
        %753 = vmatprep.subr.mxu0 0.0
        %754 = vmatpush1.msra.mxu0 %v723
        %755 = vmatprep.subr.mxu0 0.0
        %756 = vmatpush1.msra.mxu0 %v724
        %757 = vmatprep.subr.mxu0 0.0
        %758 = vmatpush1.msra.mxu0 %v725
        %759 = vmatprep.subr.mxu0 0.0
        %760 = vmatpush1.msra.mxu0 %v726
        %761 = vmatprep.subr.mxu0 0.0
        %762 = vmatpush1.msra.mxu0 %v727
        %763 = vmatprep.subr.mxu0 0.0
        %764 = vmatpush1.msra.mxu0 %v728
        %765 = vmatprep.subr.mxu0 0.0
        %766 = vmatpush1.msra.mxu0 %v729
        %767 = vmatprep.subr.mxu0 0.0
        %768 = vmatpush1.msra.mxu0 %v730
        %769 = vmatprep.subr.mxu0 0.0
        %770 = vmatpush1.msra.mxu0 %v731
        %771 = vmatprep.subr.mxu0 0.0
        %772 = vmatpush1.msra.mxu0 0.0
        %773 = vmatprep.subr.mxu0 0.0
        %774 = vmatpush1.msra.mxu0 0.0
        %775 = vmatprep.subr.mxu0 0.0
        %776 = vmatpush1.msra.mxu0 0.0
        %777 = vmatprep.subr.mxu0 0.0
        %778 = vmatpush1.msra.mxu0 0.0
        %779 = vmatprep.subr.mxu0 0.0
        %780 = vmatpush1.msra.mxu0 0.0
        %781 = vmatprep.subr.mxu0 0.0
        %782 = vmatpush1.msra.mxu0 0.0
        %783 = vmatprep.subr.mxu0 0.0
        %784 = vmatpush1.msra.mxu0 0.0
        %785 = vmatprep.subr.mxu0 0.0
        %786 = vmatpush1.msra.mxu0 0.0
        %787 = vmatprep.subr.mxu0 0.0
        %788 = vmatpush1.msra.mxu0 0.0
        %789 = vmatprep.subr.mxu0 0.0
        %790 = vmatpush1.msra.mxu0 0.0
        %791 = vmatprep.subr.mxu0 0.0
        %792 = vmatpush1.msra.mxu0 0.0
        %793 = vmatprep.subr.mxu0 0.0
        %794 = vmatpush1.msra.mxu0 0.0
        %795 = vmatprep.subr.mxu0 0.0
        %796 = vmatpush1.msra.mxu0 0.0
        %797 = vmatprep.subr.mxu0 0.0
        %798 = vmatpush1.msra.mxu0 0.0
        %799 = vmatprep.subr.mxu0 0.0
        %800 = vmatpush1.msra.mxu0 0.0
        %801 = vmatprep.subr.mxu0 0.0
        %802 = vmatpush1.msra.mxu0 0.0
        %803 = vmatprep.mubr.f32.mxu0 0.0
        %804 = vmatmul.mubr.f32.gmra.mrb[0].mxu0 %v714
        %v805 = vpop.f32.mrb[0].mxu0
        %v806 = vadd.f32 %v737, %v805
        %v807 = vpop.f32.mrb[0].mxu0
        %808 = vmatprep.mubr.f32.mxu0 0.0
        %809 = vmatmul.mubr.f32.gmra.mrb[0].mxu0 %v715
        %v810 = vpop.f32.mrb[0].mxu0
        %v811 = vadd.f32 %v737, %v810
        %v812 = vpop.f32.mrb[0].mxu0
        %813 = vdwg.mxu0
        %v814 = vld [vmem:[%s0] sm:$0xff]
        %v815 = vld [vmem:[%s0 + $0x8] sm:$0xff]
        %v816 = vld [vmem:[%s0 + $0x10] sm:$0xff]
        %v817 = vld [vmem:[%s0 + $0x18] sm:$0xff]
        %v818 = vld [vmem:[%s526] sm:$0xff]
        %v819 = vld [vmem:[%s526 + $0x8] sm:$0xff]
        %v820 = vld [vmem:[%s526 + $0x10] sm:$0xff]
        %vm821 = vcmask 64512
        %v823 = vsel %vm821, %v814, 0
        %v826 = vsel %vm821, %v815, 0
        %v829 = vsel %vm821, %v816, 0
        %v832 = vsel %vm821, %v817, 0
        %834 = vmatprep.subr.mxu0 %v819
        %835 = vmatpush1.msra.mxu0 %v818
        %836 = vmatprep.subr.mxu0 0.0
        %837 = vmatpush1.msra.mxu0 0.0
        %838 = vmatprep.subr.mxu0 0.0
        %839 = vmatpush1.msra.mxu0 0.0
        %840 = vmatprep.subr.mxu0 0.0
        %841 = vmatpush1.msra.mxu0 0.0
        %842 = vmatprep.subr.mxu0 0.0
        %843 = vmatpush1.msra.mxu0 0.0
        %844 = vmatprep.subr.mxu0 0.0
        %845 = vmatpush1.msra.mxu0 0.0
        %846 = vmatprep.subr.mxu0 0.0
        %847 = vmatpush1.msra.mxu0 0.0
        %848 = vmatprep.subr.mxu0 0.0
        %849 = vmatpush1.msra.mxu0 0.0
        %850 = vmatprep.subr.mxu0 0.0
        %851 = vmatpush1.msra.mxu0 0.0
        %852 = vmatprep.subr.mxu0 0.0
        %853 = vmatpush1.msra.mxu0 0.0
        %854 = vmatprep.subr.mxu0 0.0
        %855 = vmatpush1.msra.mxu0 0.0
        %856 = vmatprep.subr.mxu0 0.0
        %857 = vmatpush1.msra.mxu0 0.0
        %858 = vmatprep.subr.mxu0 0.0
        %859 = vmatpush1.msra.mxu0 0.0
        %860 = vmatprep.subr.mxu0 0.0
        %861 = vmatpush1.msra.mxu0 0.0
        %862 = vmatprep.subr.mxu0 0.0
        %863 = vmatpush1.msra.mxu0 0.0
        %864 = vmatprep.subr.mxu0 0.0
        %865 = vmatpush1.msra.mxu0 0.0
        %866 = vmatprep.subr.mxu0 0.0
        %867 = vmatpush1.msra.mxu0 0.0
        %868 = vmatprep.subr.mxu0 0.0
        %869 = vmatpush1.msra.mxu0 0.0
        %870 = vmatprep.subr.mxu0 0.0
        %871 = vmatpush1.msra.mxu0 0.0
        %872 = vmatprep.subr.mxu0 0.0
        %873 = vmatpush1.msra.mxu0 0.0
        %874 = vmatprep.subr.mxu0 0.0
        %875 = vmatpush1.msra.mxu0 0.0
        %876 = vmatprep.subr.mxu0 0.0
        %877 = vmatpush1.msra.mxu0 0.0
        %878 = vmatprep.subr.mxu0 0.0
        %879 = vmatpush1.msra.mxu0 0.0
        %880 = vmatprep.subr.mxu0 0.0
        %881 = vmatpush1.msra.mxu0 0.0
        %882 = vmatprep.subr.mxu0 0.0
        %883 = vmatpush1.msra.mxu0 0.0
        %884 = vmatprep.subr.mxu0 0.0
        %885 = vmatpush1.msra.mxu0 0.0
        %886 = vmatprep.subr.mxu0 0.0
        %887 = vmatpush1.msra.mxu0 0.0
        %888 = vmatprep.subr.mxu0 0.0
        %889 = vmatpush1.msra.mxu0 0.0
        %890 = vmatprep.subr.mxu0 0.0
        %891 = vmatpush1.msra.mxu0 0.0
        %892 = vmatprep.subr.mxu0 0.0
        %893 = vmatpush1.msra.mxu0 0.0
        %894 = vmatprep.subr.mxu0 0.0
        %895 = vmatpush1.msra.mxu0 0.0
        %896 = vmatprep.subr.mxu0 0.0
        %897 = vmatpush1.msra.mxu0 0.0
        %898 = vmatprep.mubr.f32.mxu0 0.0
        %899 = vmatmul.mubr.f32.gmra.mrb[0].mxu0 %v823
        %v900 = vpop.f32.mrb[0].mxu0
        %v901 = vadd.f32 0.0, %v900
        %v902 = vpop.f32.mrb[0].mxu0
        %v903 = vadd.f32 0.0, %v902
        %904 = vmatprep.mubr.f32.mxu0 0.0
        %905 = vmatmul.mubr.f32.gmra.mrb[0].mxu0 %v826
        %v906 = vpop.f32.mrb[0].mxu0
        %v907 = vadd.f32 0.0, %v906
        %v908 = vpop.f32.mrb[0].mxu0
        %v909 = vadd.f32 0.0, %v908
        %910 = vmatprep.mubr.f32.mxu0 0.0
        %911 = vmatmul.mubr.f32.gmra.mrb[0].mxu0 %v829
        %v912 = vpop.f32.mrb[0].mxu0
        %v913 = vadd.f32 0.0, %v912
        %v914 = vpop.f32.mrb[0].mxu0
        %v915 = vadd.f32 0.0, %v914
        %916 = vmatprep.mubr.f32.mxu0 0.0
        %917 = vmatmul.mubr.f32.gmra.mrb[0].mxu0 %v832
        %v918 = vpop.f32.mrb[0].mxu0
        %v919 = vadd.f32 0.0, %v918
        %v920 = vpop.f32.mrb[0].mxu0
        %v921 = vadd.f32 0.0, %v920
        %922 = vdwg.mxu0
        %923 = vmatprep.subr.mxu0 0.0
        %924 = vmatpush1.msra.mxu0 %v820
        %925 = vmatprep.subr.mxu0 0.0
        %926 = vmatpush1.msra.mxu0 0.0
        %927 = vmatprep.subr.mxu0 0.0
        %928 = vmatpush1.msra.mxu0 0.0
        %929 = vmatprep.subr.mxu0 0.0
        %930 = vmatpush1.msra.mxu0 0.0
        %931 = vmatprep.subr.mxu0 0.0
        %932 = vmatpush1.msra.mxu0 0.0
        %933 = vmatprep.subr.mxu0 0.0
        %934 = vmatpush1.msra.mxu0 0.0
        %935 = vmatprep.subr.mxu0 0.0
        %936 = vmatpush1.msra.mxu0 0.0
        %937 = vmatprep.subr.mxu0 0.0
        %938 = vmatpush1.msra.mxu0 0.0
        %939 = vmatprep.subr.mxu0 0.0
        %940 = vmatpush1.msra.mxu0 0.0
        %941 = vmatprep.subr.mxu0 0.0
        %942 = vmatpush1.msra.mxu0 0.0
        %943 = vmatprep.subr.mxu0 0.0
        %944 = vmatpush1.msra.mxu0 0.0
        %945 = vmatprep.subr.mxu0 0.0
        %946 = vmatpush1.msra.mxu0 0.0
        %947 = vmatprep.subr.mxu0 0.0
        %948 = vmatpush1.msra.mxu0 0.0
        %949 = vmatprep.subr.mxu0 0.0
        %950 = vmatpush1.msra.mxu0 0.0
        %951 = vmatprep.subr.mxu0 0.0
        %952 = vmatpush1.msra.mxu0 0.0
        %953 = vmatprep.subr.mxu0 0.0
        %954 = vmatpush1.msra.mxu0 0.0
        %955 = vmatprep.subr.mxu0 0.0
        %956 = vmatpush1.msra.mxu0 0.0
        %957 = vmatprep.subr.mxu0 0.0
        %958 = vmatpush1.msra.mxu0 0.0
        %959 = vmatprep.subr.mxu0 0.0
        %960 = vmatpush1.msra.mxu0 0.0
        %961 = vmatprep.subr.mxu0 0.0
        %962 = vmatpush1.msra.mxu0 0.0
        %963 = vmatprep.subr.mxu0 0.0
        %964 = vmatpush1.msra.mxu0 0.0
        %965 = vmatprep.subr.mxu0 0.0
        %966 = vmatpush1.msra.mxu0 0.0
        %967 = vmatprep.subr.mxu0 0.0
        %968 = vmatpush1.msra.mxu0 0.0
        %969 = vmatprep.subr.mxu0 0.0
        %970 = vmatpush1.msra.mxu0 0.0
        %971 = vmatprep.subr.mxu0 0.0
        %972 = vmatpush1.msra.mxu0 0.0
        %973 = vmatprep.subr.mxu0 0.0
        %974 = vmatpush1.msra.mxu0 0.0
        %975 = vmatprep.subr.mxu0 0.0
        %976 = vmatpush1.msra.mxu0 0.0
        %977 = vmatprep.subr.mxu0 0.0
        %978 = vmatpush1.msra.mxu0 0.0
        %979 = vmatprep.subr.mxu0 0.0
        %980 = vmatpush1.msra.mxu0 0.0
        %981 = vmatprep.subr.mxu0 0.0
        %982 = vmatpush1.msra.mxu0 0.0
        %983 = vmatprep.subr.mxu0 0.0
        %984 = vmatpush1.msra.mxu0 0.0
        %985 = vmatprep.subr.mxu0 0.0
        %986 = vmatpush1.msra.mxu0 0.0
        %987 = vmatprep.mubr.f32.mxu0 0.0
        %988 = vmatmul.mubr.f32.gmra.mrb[0].mxu0 %v823
        %v989 = vpop.f32.mrb[0].mxu0
        %v990 = vadd.f32 0.0, %v989
        %v991 = vpop.f32.mrb[0].mxu0
        %992 = vmatprep.mubr.f32.mxu0 0.0
        %993 = vmatmul.mubr.f32.gmra.mrb[0].mxu0 %v826
        %v994 = vpop.f32.mrb[0].mxu0
        %v995 = vadd.f32 0.0, %v994
        %v996 = vpop.f32.mrb[0].mxu0
        %997 = vmatprep.mubr.f32.mxu0 0.0
        %998 = vmatmul.mubr.f32.gmra.mrb[0].mxu0 %v829
        %v999 = vpop.f32.mrb[0].mxu0
        %v1000 = vadd.f32 0.0, %v999
        %v1001 = vpop.f32.mrb[0].mxu0
        %1002 = vmatprep.mubr.f32.mxu0 0.0
        %1003 = vmatmul.mubr.f32.gmra.mrb[0].mxu0 %v832
        %v1004 = vpop.f32.mrb[0].mxu0
        %v1005 = vadd.f32 0.0, %v1004
        %v1006 = vpop.f32.mrb[0].mxu0
        %1007 = vdwg.mxu0
        %v1008 = vmul.f32 %v901, %v806
        %v1009 = vmul.f32 %v907, %v811
        %v1010 = vmul.f32 %v1008, %v913
        %v1011 = vmul.f32 %v1009, %v919
        %v1012 = vmul.f32 %v903, %v806
        %v1013 = vmul.f32 %v909, %v811
        %v1014 = vmul.f32 %v1012, %v915
        %v1015 = vmul.f32 %v1013, %v921
        %v1016 = vmul.f32 %v990, %v806
        %v1017 = vmul.f32 %v995, %v811
        %v1018 = vmul.f32 %v1016, %v1000
        %v1019 = vmul.f32 %v1017, %v1005
        %v1020 = vld [vmem:[#allocation8] sm:$0xff]
        %v1021 = vld [vmem:[#allocation8 + $0x8] sm:$0xff]
        %v1022 = vld [vmem:[#allocation8 + $0x10] sm:$0xff]
        %v1023 = vld [vmem:[#allocation8 + $0x18] sm:$0xff]
        %v1024 = vld [vmem:[#allocation8 + $0x20] sm:$0xff]
        %v1025 = vld [vmem:[#allocation8 + $0x28] sm:$0xff]
        %v1026 = vld [vmem:[#allocation8 + $0x30] sm:$0xff]
        %v1027 = vld [vmem:[#allocation8 + $0x38] sm:$0xff]
        %v1028 = vld [vmem:[#allocation8 + $0x40] sm:$0xff]
        %v1029 = vld [vmem:[#allocation8 + $0x48] sm:$0xff]
        %v1030 = vld [vmem:[#allocation8 + $0x50] sm:$0xff]
        %v1031 = vld [vmem:[#allocation8 + $0x58] sm:$0xff]
        %v1032 = vld [vmem:[#allocation8 + $0x60] sm:$0xff]
        %v1033 = vld [vmem:[#allocation8 + $0x68] sm:$0xff]
        %v1034 = vld [vmem:[#allocation8 + $0x70] sm:$0xff]
        %v1035 = vld [vmem:[#allocation8 + $0x78] sm:$0xff]
        %v1036 = vld [vmem:[#allocation8 + $0x80] sm:$0xff]
        %v1037 = vld [vmem:[#allocation8 + $0x88] sm:$0xff]
        %v1038 = vld [vmem:[#allocation8 + $0x90] sm:$0xff]
        %v1039 = vld [vmem:[#allocation8 + $0x98] sm:$0xff]
        %v1040 = vld [vmem:[#allocation8 + $0xa0] sm:$0xff]
        %v1041 = vld [vmem:[#allocation8 + $0xa8] sm:$0xff]
        %v1042 = vld [vmem:[#allocation8 + $0xb0] sm:$0xff]
        %v1043 = vld [vmem:[#allocation8 + $0xb8] sm:$0xff]
        %v1044 = vld [vmem:[#allocation8 + $0xc0] sm:$0xff]
        %v1045 = vld [vmem:[#allocation8 + $0xc8] sm:$0xff]
        %v1046 = vld [vmem:[#allocation8 + $0xd0] sm:$0xff]
        %v1047 = vld [vmem:[#allocation8 + $0xd8] sm:$0xff]
        %v1048 = vld [vmem:[#allocation8 + $0xe0] sm:$0xff]
        %v1049 = vld [vmem:[#allocation8 + $0xe8] sm:$0xff]
        %v1050 = vld [vmem:[#allocation8 + $0xf0] sm:$0xff]
        %v1051 = vld [vmem:[#allocation8 + $0xf8] sm:$0xff]
        %v1052 = vld [vmem:[%s10] sm:$0x3]
        %v1054 = vlaneseq
        %v1055 = vshrl.u32 %v1054, 7
        %v1056 = vsub.s32 0, %v1055
        %v1057 = vrot.slane %v1052, %v1056
        %v1058 = vlaneseq
        %v1059 = vshrl.u32 %v1058, 7
        %v1060 = vsub.s32 1, %v1059
        %v1061 = vrot.slane %v1052, %v1060
        %1064 = vmatprep.subr.mxu0 %v1021
        %1065 = vmatpush1.msra.mxu0 %v1020
        %1066 = vmatprep.subr.mxu0 %v1023
        %1067 = vmatpush1.msra.mxu0 %v1022
        %1068 = vmatprep.subr.mxu0 %v1025
        %1069 = vmatpush1.msra.mxu0 %v1024
        %1070 = vmatprep.subr.mxu0 %v1027
        %1071 = vmatpush1.msra.mxu0 %v1026
        %1072 = vmatprep.subr.mxu0 %v1029
        %1073 = vmatpush1.msra.mxu0 %v1028
        %1074 = vmatprep.subr.mxu0 %v1031
        %1075 = vmatpush1.msra.mxu0 %v1030
        %1076 = vmatprep.subr.mxu0 %v1033
        %1077 = vmatpush1.msra.mxu0 %v1032
        %1078 = vmatprep.subr.mxu0 %v1035
        %1079 = vmatpush1.msra.mxu0 %v1034
        %1080 = vmatprep.subr.mxu0 %v1037
        %1081 = vmatpush1.msra.mxu0 %v1036
        %1082 = vmatprep.subr.mxu0 %v1039
        %1083 = vmatpush1.msra.mxu0 %v1038
        %1084 = vmatprep.subr.mxu0 %v1041
        %1085 = vmatpush1.msra.mxu0 %v1040
        %1086 = vmatprep.subr.mxu0 %v1043
        %1087 = vmatpush1.msra.mxu0 %v1042
        %1088 = vmatprep.subr.mxu0 %v1045
        %1089 = vmatpush1.msra.mxu0 %v1044
        %1090 = vmatprep.subr.mxu0 %v1047
        %1091 = vmatpush1.msra.mxu0 %v1046
        %1092 = vmatprep.subr.mxu0 %v1049
        %1093 = vmatpush1.msra.mxu0 %v1048
        %1094 = vmatprep.subr.mxu0 %v1051
        %1095 = vmatpush1.msra.mxu0 %v1050
        %1096 = vmatprep.subr.mxu0 0.0
        %1097 = vmatpush1.msra.mxu0 0.0
        %1098 = vmatprep.subr.mxu0 0.0
        %1099 = vmatpush1.msra.mxu0 0.0
        %1100 = vmatprep.subr.mxu0 0.0
        %1101 = vmatpush1.msra.mxu0 0.0
        %1102 = vmatprep.subr.mxu0 0.0
        %1103 = vmatpush1.msra.mxu0 0.0
        %1104 = vmatprep.subr.mxu0 0.0
        %1105 = vmatpush1.msra.mxu0 0.0
        %1106 = vmatprep.subr.mxu0 0.0
        %1107 = vmatpush1.msra.mxu0 0.0
        %1108 = vmatprep.subr.mxu0 0.0
        %1109 = vmatpush1.msra.mxu0 0.0
        %1110 = vmatprep.subr.mxu0 0.0
        %1111 = vmatpush1.msra.mxu0 0.0
        %1112 = vmatprep.subr.mxu0 0.0
        %1113 = vmatpush1.msra.mxu0 0.0
        %1114 = vmatprep.subr.mxu0 0.0
        %1115 = vmatpush1.msra.mxu0 0.0
        %1116 = vmatprep.subr.mxu0 0.0
        %1117 = vmatpush1.msra.mxu0 0.0
        %1118 = vmatprep.subr.mxu0 0.0
        %1119 = vmatpush1.msra.mxu0 0.0
        %1120 = vmatprep.subr.mxu0 0.0
        %1121 = vmatpush1.msra.mxu0 0.0
        %1122 = vmatprep.subr.mxu0 0.0
        %1123 = vmatpush1.msra.mxu0 0.0
        %1124 = vmatprep.subr.mxu0 0.0
        %1125 = vmatpush1.msra.mxu0 0.0
        %1126 = vmatprep.subr.mxu0 0.0
        %1127 = vmatpush1.msra.mxu0 0.0
        %1128 = vmatprep.mubr.f32.mxu0 0.0
        %1129 = vmatmul.mubr.f32.gmra.mrb[0].mxu0 %v1010
        %v1130 = vpop.f32.mrb[0].mxu0
        %v1131 = vadd.f32 %v1057, %v1130
        %v1132 = vpop.f32.mrb[0].mxu0
        %v1133 = vadd.f32 %v1061, %v1132
        %1134 = vmatprep.mubr.f32.mxu0 0.0
        %1135 = vmatmul.mubr.f32.gmra.mrb[0].mxu0 %v1011
        %v1136 = vpop.f32.mrb[0].mxu0
        %v1137 = vadd.f32 %v1057, %v1136
        %v1138 = vpop.f32.mrb[0].mxu0
        %v1139 = vadd.f32 %v1061, %v1138
        %1140 = vmatprep.mubr.f32.mxu0 0.0
        %1141 = vmatmul.mubr.f32.gmra.mrb[0].mxu0 %v1014
        %v1142 = vpop.f32.mrb[0].mxu0
        %v1143 = vadd.f32 %v1057, %v1142
        %v1144 = vpop.f32.mrb[0].mxu0
        %v1145 = vadd.f32 %v1061, %v1144
        %1146 = vmatprep.mubr.f32.mxu0 0.0
        %1147 = vmatmul.mubr.f32.gmra.mrb[0].mxu0 %v1015
        %v1148 = vpop.f32.mrb[0].mxu0
        %v1149 = vadd.f32 %v1057, %v1148
        %v1150 = vpop.f32.mrb[0].mxu0
        %v1151 = vadd.f32 %v1061, %v1150
        %1152 = vmatprep.mubr.f32.mxu0 0.0
        %1153 = vmatmul.mubr.f32.gmra.mrb[0].mxu0 %v1018
        %v1154 = vpop.f32.mrb[0].mxu0
        %v1155 = vadd.f32 %v1057, %v1154
        %v1156 = vpop.f32.mrb[0].mxu0
        %v1157 = vadd.f32 %v1061, %v1156
        %1158 = vmatprep.mubr.f32.mxu0 0.0
        %1159 = vmatmul.mubr.f32.gmra.mrb[0].mxu0 %v1019
        %v1160 = vpop.f32.mrb[0].mxu0
        %v1161 = vadd.f32 %v1057, %v1160
        %v1162 = vpop.f32.mrb[0].mxu0
        %v1163 = vadd.f32 %v1061, %v1162
        %1164 = vdwg.mxu0
        %v1165 = vmax.f32 %v1131, 0.0
        %v1166 = vmax.f32 %v1133, 0.0
        %v1167 = vmax.f32 %v1137, 0.0
        %v1168 = vmax.f32 %v1139, 0.0
        %v1169 = vmax.f32 %v1143, 0.0
        %v1170 = vmax.f32 %v1145, 0.0
        %v1171 = vmax.f32 %v1149, 0.0
        %v1172 = vmax.f32 %v1151, 0.0
        %v1173 = vmax.f32 %v1155, 0.0
        %v1174 = vmax.f32 %v1157, 0.0
        %v1175 = vmax.f32 %v1161, 0.0
        %v1176 = vmax.f32 %v1163, 0.0
        %v1177 = vand.u32 2147483647, %v1131
        %v1178 = vand.u32 2147483647, %v1133
        %v1179 = vand.u32 2147483647, %v1137
        %v1180 = vand.u32 2147483647, %v1139
        %v1181 = vand.u32 2147483647, %v1143
        %v1182 = vand.u32 2147483647, %v1145
        %v1183 = vand.u32 2147483647, %v1149
        %v1184 = vand.u32 2147483647, %v1151
        %v1185 = vand.u32 2147483647, %v1155
        %v1186 = vand.u32 2147483647, %v1157
        %v1187 = vand.u32 2147483647, %v1161
        %v1188 = vand.u32 2147483647, %v1163
        %v1189 = vsub.f32 0.0, %v1177
        %v1190 = vsub.f32 0.0, %v1178
        %v1191 = vsub.f32 0.0, %v1179
        %v1192 = vsub.f32 0.0, %v1180
        %v1193 = vsub.f32 0.0, %v1181
        %v1194 = vsub.f32 0.0, %v1182
        %v1195 = vsub.f32 0.0, %v1183
        %v1196 = vsub.f32 0.0, %v1184
        %v1197 = vsub.f32 0.0, %v1185
        %v1198 = vsub.f32 0.0, %v1186
        %v1199 = vsub.f32 0.0, %v1187
        %v1200 = vsub.f32 0.0, %v1188
        %v1201 = vmul.f32 %v1189, 1.442695
        %v1202 = vpow.pop %v1201
        %v1203 = vmul.f32 %v1190, 1.442695
        %v1204 = vpow.pop %v1203
        %v1205 = vmul.f32 %v1191, 1.442695
        %v1206 = vpow.pop %v1205
        %v1207 = vmul.f32 %v1192, 1.442695
        %v1208 = vpow.pop %v1207
        %v1209 = vmul.f32 %v1193, 1.442695
        %v1210 = vpow.pop %v1209
        %v1211 = vmul.f32 %v1194, 1.442695
        %v1212 = vpow.pop %v1211
        %v1213 = vmul.f32 %v1195, 1.442695
        %v1214 = vpow.pop %v1213
        %v1215 = vmul.f32 %v1196, 1.442695
        %v1216 = vpow.pop %v1215
        %v1217 = vmul.f32 %v1197, 1.442695
        %v1218 = vpow.pop %v1217
        %v1219 = vmul.f32 %v1198, 1.442695
        %v1220 = vpow.pop %v1219
        %v1221 = vmul.f32 %v1199, 1.442695
        %v1222 = vpow.pop %v1221
        %v1223 = vmul.f32 %v1200, 1.442695
        %v1224 = vpow.pop %v1223
        %v1225 = vadd.f32 %v1202, 1.0
        %v1226 = vadd.f32 %v1204, 1.0
        %v1227 = vadd.f32 %v1206, 1.0
        %v1228 = vadd.f32 %v1208, 1.0
        %v1229 = vadd.f32 %v1210, 1.0
        %v1230 = vadd.f32 %v1212, 1.0
        %v1231 = vadd.f32 %v1214, 1.0
        %v1232 = vadd.f32 %v1216, 1.0
        %v1233 = vadd.f32 %v1218, 1.0
        %v1234 = vadd.f32 %v1220, 1.0
        %v1235 = vadd.f32 %v1222, 1.0
        %v1236 = vadd.f32 %v1224, 1.0
        %v1237 = vlog2.pop %v1225
        %v1238 = vmul.f32 %v1237, 0.6931472
        %v1239 = vlog2.pop %v1226
        %v1240 = vmul.f32 %v1239, 0.6931472
        %v1241 = vlog2.pop %v1227
        %v1242 = vmul.f32 %v1241, 0.6931472
        %v1243 = vlog2.pop %v1228
        %v1244 = vmul.f32 %v1243, 0.6931472
        %v1245 = vlog2.pop %v1229
        %v1246 = vmul.f32 %v1245, 0.6931472
        %v1247 = vlog2.pop %v1230
        %v1248 = vmul.f32 %v1247, 0.6931472
        %v1249 = vlog2.pop %v1231
        %v1250 = vmul.f32 %v1249, 0.6931472
        %v1251 = vlog2.pop %v1232
        %v1252 = vmul.f32 %v1251, 0.6931472
        %v1253 = vlog2.pop %v1233
        %v1254 = vmul.f32 %v1253, 0.6931472
        %v1255 = vlog2.pop %v1234
        %v1256 = vmul.f32 %v1255, 0.6931472
        %v1257 = vlog2.pop %v1235
        %v1258 = vmul.f32 %v1257, 0.6931472
        %v1259 = vlog2.pop %v1236
        %v1260 = vmul.f32 %v1259, 0.6931472
        %v1261 = vadd.f32 %v1165, %v1238
        %v1262 = vadd.f32 %v1166, %v1240
        %v1263 = vadd.f32 %v1167, %v1242
        %v1264 = vadd.f32 %v1168, %v1244
        %v1265 = vadd.f32 %v1169, %v1246
        %v1266 = vadd.f32 %v1170, %v1248
        %v1267 = vadd.f32 %v1171, %v1250
        %v1268 = vadd.f32 %v1172, %v1252
        %v1269 = vadd.f32 %v1173, %v1254
        %v1270 = vadd.f32 %v1174, %v1256
        %v1271 = vadd.f32 %v1175, %v1258
        %v1272 = vadd.f32 %v1176, %v1260
        %v1273 = vld [vmem:[#allocation10] sm:$0xff]
        %v1274 = vld [vmem:[#allocation10 + $0x8] sm:$0xff]
        %v1275 = vld [vmem:[#allocation10 + $0x10] sm:$0xff]
        %v1276 = vld [vmem:[#allocation10 + $0x18] sm:$0xff]
        %v1277 = vld [vmem:[#allocation10 + $0x20] sm:$0xff]
        %v1278 = vld [vmem:[#allocation10 + $0x28] sm:$0xff]
        %v1279 = vld [vmem:[#allocation10 + $0x30] sm:$0xff]
        %v1280 = vld [vmem:[#allocation10 + $0x38] sm:$0xff]
        %v1281 = vld [vmem:[#allocation10 + $0x40] sm:$0xff]
        %v1282 = vld [vmem:[#allocation10 + $0x48] sm:$0xff]
        %v1283 = vld [vmem:[#allocation10 + $0x50] sm:$0xff]
        %v1284 = vld [vmem:[#allocation10 + $0x58] sm:$0xff]
        %v1285 = vld [vmem:[#allocation10 + $0x60] sm:$0xff]
        %v1286 = vld [vmem:[#allocation10 + $0x68] sm:$0xff]
        %v1287 = vld [vmem:[#allocation10 + $0x70] sm:$0xff]
        %v1288 = vld [vmem:[#allocation10 + $0x78] sm:$0xff]
        %v1289 = vld [vmem:[%s12] sm:$0x1]
        %v1291 = vlaneseq
        %v1292 = vshrl.u32 %v1291, 7
        %v1293 = vsub.s32 0, %v1292
        %v1294 = vrot.slane %v1289, %v1293
        %1296 = vmatprep.subr.mxu0 0.0
        %1297 = vmatpush1.msra.mxu0 %v1273
        %1298 = vmatprep.subr.mxu0 0.0
        %1299 = vmatpush1.msra.mxu0 %v1274
        %1300 = vmatprep.subr.mxu0 0.0
        %1301 = vmatpush1.msra.mxu0 %v1275
        %1302 = vmatprep.subr.mxu0 0.0
        %1303 = vmatpush1.msra.mxu0 %v1276
        %1304 = vmatprep.subr.mxu0 0.0
        %1305 = vmatpush1.msra.mxu0 %v1277
        %1306 = vmatprep.subr.mxu0 0.0
        %1307 = vmatpush1.msra.mxu0 %v1278
        %1308 = vmatprep.subr.mxu0 0.0
        %1309 = vmatpush1.msra.mxu0 %v1279
        %1310 = vmatprep.subr.mxu0 0.0
        %1311 = vmatpush1.msra.mxu0 %v1280
        %1312 = vmatprep.subr.mxu0 0.0
        %1313 = vmatpush1.msra.mxu0 %v1281
        %1314 = vmatprep.subr.mxu0 0.0
        %1315 = vmatpush1.msra.mxu0 %v1282
        %1316 = vmatprep.subr.mxu0 0.0
        %1317 = vmatpush1.msra.mxu0 %v1283
        %1318 = vmatprep.subr.mxu0 0.0
        %1319 = vmatpush1.msra.mxu0 %v1284
        %1320 = vmatprep.subr.mxu0 0.0
        %1321 = vmatpush1.msra.mxu0 %v1285
        %1322 = vmatprep.subr.mxu0 0.0
        %1323 = vmatpush1.msra.mxu0 %v1286
        %1324 = vmatprep.subr.mxu0 0.0
        %1325 = vmatpush1.msra.mxu0 %v1287
        %1326 = vmatprep.subr.mxu0 0.0
        %1327 = vmatpush1.msra.mxu0 %v1288
        %1328 = vmatprep.subr.mxu0 0.0
        %1329 = vmatpush1.msra.mxu0 0.0
        %1330 = vmatprep.subr.mxu0 0.0
        %1331 = vmatpush1.msra.mxu0 0.0
        %1332 = vmatprep.subr.mxu0 0.0
        %1333 = vmatpush1.msra.mxu0 0.0
        %1334 = vmatprep.subr.mxu0 0.0
        %1335 = vmatpush1.msra.mxu0 0.0
        %1336 = vmatprep.subr.mxu0 0.0
        %1337 = vmatpush1.msra.mxu0 0.0
        %1338 = vmatprep.subr.mxu0 0.0
        %1339 = vmatpush1.msra.mxu0 0.0
        %1340 = vmatprep.subr.mxu0 0.0
        %1341 = vmatpush1.msra.mxu0 0.0
        %1342 = vmatprep.subr.mxu0 0.0
        %1343 = vmatpush1.msra.mxu0 0.0
        %1344 = vmatprep.subr.mxu0 0.0
        %1345 = vmatpush1.msra.mxu0 0.0
        %1346 = vmatprep.subr.mxu0 0.0
        %1347 = vmatpush1.msra.mxu0 0.0
        %1348 = vmatprep.subr.mxu0 0.0
        %1349 = vmatpush1.msra.mxu0 0.0
        %1350 = vmatprep.subr.mxu0 0.0
        %1351 = vmatpush1.msra.mxu0 0.0
        %1352 = vmatprep.subr.mxu0 0.0
        %1353 = vmatpush1.msra.mxu0 0.0
        %1354 = vmatprep.subr.mxu0 0.0
        %1355 = vmatpush1.msra.mxu0 0.0
        %1356 = vmatprep.subr.mxu0 0.0
        %1357 = vmatpush1.msra.mxu0 0.0
        %1358 = vmatprep.subr.mxu0 0.0
        %1359 = vmatpush1.msra.mxu0 0.0
        %1360 = vmatprep.mubr.f32.mxu0 0.0
        %1361 = vmatmul.mubr.f32.gmra.mrb[0].mxu0 %v1261
        %v1362 = vpop.f32.mrb[0].mxu0
        %v1363 = vadd.f32 %v1294, %v1362
        %v1364 = vpop.f32.mrb[0].mxu0
        %1365 = vmatprep.mubr.f32.mxu0 0.0
        %1366 = vmatmul.mubr.f32.gmra.mrb[0].mxu0 %v1263
        %v1367 = vpop.f32.mrb[0].mxu0
        %v1368 = vadd.f32 %v1294, %v1367
        %v1369 = vpop.f32.mrb[0].mxu0
        %1370 = vmatprep.mubr.f32.mxu0 0.0
        %1371 = vmatmul.mubr.f32.gmra.mrb[0].mxu0 %v1265
        %v1372 = vpop.f32.mrb[0].mxu0
        %v1373 = vadd.f32 %v1294, %v1372
        %v1374 = vpop.f32.mrb[0].mxu0
        %1375 = vmatprep.mubr.f32.mxu0 0.0
        %1376 = vmatmul.mubr.f32.gmra.mrb[0].mxu0 %v1267
        %v1377 = vpop.f32.mrb[0].mxu0
        %v1378 = vadd.f32 %v1294, %v1377
        %v1379 = vpop.f32.mrb[0].mxu0
        %1380 = vmatprep.mubr.f32.mxu0 0.0
        %1381 = vmatmul.mubr.f32.gmra.mrb[0].mxu0 %v1269
        %v1382 = vpop.f32.mrb[0].mxu0
        %v1383 = vadd.f32 %v1294, %v1382
        %v1384 = vpop.f32.mrb[0].mxu0
        %1385 = vmatprep.mubr.f32.mxu0 0.0
        %1386 = vmatmul.mubr.f32.gmra.mrb[0].mxu0 %v1271
        %v1387 = vpop.f32.mrb[0].mxu0
        %v1388 = vadd.f32 %v1294, %v1387
        %v1389 = vpop.f32.mrb[0].mxu0
        %1390 = vdwg.mxu0
        %v1391 = vld [vmem:[#allocation11] sm:$0xff]
        %v1392 = vld [vmem:[#allocation11 + $0x8] sm:$0xff]
        %v1393 = vld [vmem:[#allocation11 + $0x10] sm:$0xff]
        %v1394 = vld [vmem:[#allocation11 + $0x18] sm:$0xff]
        %v1395 = vld [vmem:[#allocation11 + $0x20] sm:$0xff]
        %v1396 = vld [vmem:[#allocation11 + $0x28] sm:$0xff]
        %v1397 = vld [vmem:[#allocation11 + $0x30] sm:$0xff]
        %v1398 = vld [vmem:[#allocation11 + $0x38] sm:$0xff]
        %v1399 = vld [vmem:[#allocation11 + $0x40] sm:$0xff]
        %v1400 = vld [vmem:[#allocation11 + $0x48] sm:$0xff]
        %v1401 = vld [vmem:[#allocation11 + $0x50] sm:$0xff]
        %v1402 = vld [vmem:[#allocation11 + $0x58] sm:$0xff]
        %v1403 = vld [vmem:[#allocation11 + $0x60] sm:$0xff]
        %v1404 = vld [vmem:[#allocation11 + $0x68] sm:$0xff]
        %v1405 = vld [vmem:[#allocation11 + $0x70] sm:$0xff]
        %v1406 = vld [vmem:[#allocation11 + $0x78] sm:$0xff]
        %v1407 = vld [vmem:[%s14] sm:$0x1]
        %v1409 = vlaneseq
        %v1410 = vshrl.u32 %v1409, 7
        %v1411 = vsub.s32 0, %v1410
        %v1412 = vrot.slane %v1407, %v1411
        %1414 = vmatprep.subr.mxu0 0.0
        %1415 = vmatpush1.msra.mxu0 %v1391
        %1416 = vmatprep.subr.mxu0 0.0
        %1417 = vmatpush1.msra.mxu0 %v1392
        %1418 = vmatprep.subr.mxu0 0.0
        %1419 = vmatpush1.msra.mxu0 %v1393
        %1420 = vmatprep.subr.mxu0 0.0
        %1421 = vmatpush1.msra.mxu0 %v1394
        %1422 = vmatprep.subr.mxu0 0.0
        %1423 = vmatpush1.msra.mxu0 %v1395
        %1424 = vmatprep.subr.mxu0 0.0
        %1425 = vmatpush1.msra.mxu0 %v1396
        %1426 = vmatprep.subr.mxu0 0.0
        %1427 = vmatpush1.msra.mxu0 %v1397
        %1428 = vmatprep.subr.mxu0 0.0
        %1429 = vmatpush1.msra.mxu0 %v1398
        %1430 = vmatprep.subr.mxu0 0.0
        %1431 = vmatpush1.msra.mxu0 %v1399
        %1432 = vmatprep.subr.mxu0 0.0
        %1433 = vmatpush1.msra.mxu0 %v1400
        %1434 = vmatprep.subr.mxu0 0.0
        %1435 = vmatpush1.msra.mxu0 %v1401
        %1436 = vmatprep.subr.mxu0 0.0
        %1437 = vmatpush1.msra.mxu0 %v1402
        %1438 = vmatprep.subr.mxu0 0.0
        %1439 = vmatpush1.msra.mxu0 %v1403
        %1440 = vmatprep.subr.mxu0 0.0
        %1441 = vmatpush1.msra.mxu0 %v1404
        %1442 = vmatprep.subr.mxu0 0.0
        %1443 = vmatpush1.msra.mxu0 %v1405
        %1444 = vmatprep.subr.mxu0 0.0
        %1445 = vmatpush1.msra.mxu0 %v1406
        %1446 = vmatprep.subr.mxu0 0.0
        %1447 = vmatpush1.msra.mxu0 0.0
        %1448 = vmatprep.subr.mxu0 0.0
        %1449 = vmatpush1.msra.mxu0 0.0
        %1450 = vmatprep.subr.mxu0 0.0
        %1451 = vmatpush1.msra.mxu0 0.0
        %1452 = vmatprep.subr.mxu0 0.0
        %1453 = vmatpush1.msra.mxu0 0.0
        %1454 = vmatprep.subr.mxu0 0.0
        %1455 = vmatpush1.msra.mxu0 0.0
        %1456 = vmatprep.subr.mxu0 0.0
        %1457 = vmatpush1.msra.mxu0 0.0
        %1458 = vmatprep.subr.mxu0 0.0
        %1459 = vmatpush1.msra.mxu0 0.0
        %1460 = vmatprep.subr.mxu0 0.0
        %1461 = vmatpush1.msra.mxu0 0.0
        %1462 = vmatprep.subr.mxu0 0.0
        %1463 = vmatpush1.msra.mxu0 0.0
        %1464 = vmatprep.subr.mxu0 0.0
        %1465 = vmatpush1.msra.mxu0 0.0
        %1466 = vmatprep.subr.mxu0 0.0
        %1467 = vmatpush1.msra.mxu0 0.0
        %1468 = vmatprep.subr.mxu0 0.0
        %1469 = vmatpush1.msra.mxu0 0.0
        %1470 = vmatprep.subr.mxu0 0.0
        %1471 = vmatpush1.msra.mxu0 0.0
        %1472 = vmatprep.subr.mxu0 0.0
        %1473 = vmatpush1.msra.mxu0 0.0
        %1474 = vmatprep.subr.mxu0 0.0
        %1475 = vmatpush1.msra.mxu0 0.0
        %1476 = vmatprep.subr.mxu0 0.0
        %1477 = vmatpush1.msra.mxu0 0.0
        %1478 = vmatprep.mubr.f32.mxu0 0.0
        %1479 = vmatmul.mubr.f32.gmra.mrb[0].mxu0 %v1262
        %v1480 = vpop.f32.mrb[0].mxu0
        %v1481 = vadd.f32 %v1412, %v1480
        %v1482 = vpop.f32.mrb[0].mxu0
        %1483 = vmatprep.mubr.f32.mxu0 0.0
        %1484 = vmatmul.mubr.f32.gmra.mrb[0].mxu0 %v1264
        %v1485 = vpop.f32.mrb[0].mxu0
        %v1486 = vadd.f32 %v1412, %v1485
        %v1487 = vpop.f32.mrb[0].mxu0
        %1488 = vmatprep.mubr.f32.mxu0 0.0
        %1489 = vmatmul.mubr.f32.gmra.mrb[0].mxu0 %v1266
        %v1490 = vpop.f32.mrb[0].mxu0
        %v1491 = vadd.f32 %v1412, %v1490
        %v1492 = vpop.f32.mrb[0].mxu0
        %1493 = vmatprep.mubr.f32.mxu0 0.0
        %1494 = vmatmul.mubr.f32.gmra.mrb[0].mxu0 %v1268
        %v1495 = vpop.f32.mrb[0].mxu0
        %v1496 = vadd.f32 %v1412, %v1495
        %v1497 = vpop.f32.mrb[0].mxu0
        %1498 = vmatprep.mubr.f32.mxu0 0.0
        %1499 = vmatmul.mubr.f32.gmra.mrb[0].mxu0 %v1270
        %v1500 = vpop.f32.mrb[0].mxu0
        %v1501 = vadd.f32 %v1412, %v1500
        %v1502 = vpop.f32.mrb[0].mxu0
        %1503 = vmatprep.mubr.f32.mxu0 0.0
        %1504 = vmatmul.mubr.f32.gmra.mrb[0].mxu0 %v1272
        %v1505 = vpop.f32.mrb[0].mxu0
        %v1506 = vadd.f32 %v1412, %v1505
        %v1507 = vpop.f32.mrb[0].mxu0
        %1508 = vdwg.mxu0
        %v1509 = vld [vmem:[%s2] sm:$0xff]
        %v1511 = vsel %vm616, %v1509, 0
        %1513 = vmatprep.subr.mxu0 0.0
        %1514 = vmatpush1.msra.mxu0 %v1481
        %1515 = vmatprep.subr.mxu0 0.0
        %1516 = vmatpush1.msra.mxu0 %v1486
        %1517 = vmatprep.subr.mxu0 0.0
        %1518 = vmatpush1.msra.mxu0 0.0
        %1519 = vmatprep.subr.mxu0 0.0
        %1520 = vmatpush1.msra.mxu0 0.0
        %1521 = vmatprep.subr.mxu0 0.0
        %1522 = vmatpush1.msra.mxu0 0.0
        %1523 = vmatprep.subr.mxu0 0.0
        %1524 = vmatpush1.msra.mxu0 0.0
        %1525 = vmatprep.subr.mxu0 0.0
        %1526 = vmatpush1.msra.mxu0 0.0
        %1527 = vmatprep.subr.mxu0 0.0
        %1528 = vmatpush1.msra.mxu0 0.0
        %1529 = vmatprep.subr.mxu0 0.0
        %1530 = vmatpush1.msra.mxu0 0.0
        %1531 = vmatprep.subr.mxu0 0.0
        %1532 = vmatpush1.msra.mxu0 0.0
        %1533 = vmatprep.subr.mxu0 0.0
        %1534 = vmatpush1.msra.mxu0 0.0
        %1535 = vmatprep.subr.mxu0 0.0
        %1536 = vmatpush1.msra.mxu0 0.0
        %1537 = vmatprep.subr.mxu0 0.0
        %1538 = vmatpush1.msra.mxu0 0.0
        %1539 = vmatprep.subr.mxu0 0.0
        %1540 = vmatpush1.msra.mxu0 0.0
        %1541 = vmatprep.subr.mxu0 0.0
        %1542 = vmatpush1.msra.mxu0 0.0
        %1543 = vmatprep.subr.mxu0 0.0
        %1544 = vmatpush1.msra.mxu0 0.0
        %1545 = vmatprep.subr.mxu0 0.0
        %1546 = vmatpush1.msra.mxu0 0.0
        %1547 = vmatprep.subr.mxu0 0.0
        %1548 = vmatpush1.msra.mxu0 0.0
        %1549 = vmatprep.subr.mxu0 0.0
        %1550 = vmatpush1.msra.mxu0 0.0
        %1551 = vmatprep.subr.mxu0 0.0
        %1552 = vmatpush1.msra.mxu0 0.0
        %1553 = vmatprep.subr.mxu0 0.0
        %1554 = vmatpush1.msra.mxu0 0.0
        %1555 = vmatprep.subr.mxu0 0.0
        %1556 = vmatpush1.msra.mxu0 0.0
        %1557 = vmatprep.subr.mxu0 0.0
        %1558 = vmatpush1.msra.mxu0 0.0
        %1559 = vmatprep.subr.mxu0 0.0
        %1560 = vmatpush1.msra.mxu0 0.0
        %1561 = vmatprep.subr.mxu0 0.0
        %1562 = vmatpush1.msra.mxu0 0.0
        %1563 = vmatprep.subr.mxu0 0.0
        %1564 = vmatpush1.msra.mxu0 0.0
        %1565 = vmatprep.subr.mxu0 0.0
        %1566 = vmatpush1.msra.mxu0 0.0
        %1567 = vmatprep.subr.mxu0 0.0
        %1568 = vmatpush1.msra.mxu0 0.0
        %1569 = vmatprep.subr.mxu0 0.0
        %1570 = vmatpush1.msra.mxu0 0.0
        %1571 = vmatprep.subr.mxu0 0.0
        %1572 = vmatpush1.msra.mxu0 0.0
        %1573 = vmatprep.subr.mxu0 0.0
        %1574 = vmatpush1.msra.mxu0 0.0
        %1575 = vmatprep.subr.mxu0 0.0
        %1576 = vmatpush1.msra.mxu0 0.0
        %1577 = vmatprep.mubr.f32.mxu0 0.0
        %1578 = vmatmul.mubr.f32.gmra.mrb[0].mxu0 %v1511
        %v1579 = vpop.f32.mrb[0].mxu0
        %v1580 = vadd.f32 0.0, %v1579
        %v1581 = vpop.f32.mrb[0].mxu0
        %1582 = vdwg.mxu0
        %1583 = vmatprep.subr.mxu0 0.0
        %1584 = vmatpush1.msra.mxu0 %v1491
        %1585 = vmatprep.subr.mxu0 0.0
        %1586 = vmatpush1.msra.mxu0 %v1496
        %1587 = vmatprep.subr.mxu0 0.0
        %1588 = vmatpush1.msra.mxu0 0.0
        %1589 = vmatprep.subr.mxu0 0.0
        %1590 = vmatpush1.msra.mxu0 0.0
        %1591 = vmatprep.subr.mxu0 0.0
        %1592 = vmatpush1.msra.mxu0 0.0
        %1593 = vmatprep.subr.mxu0 0.0
        %1594 = vmatpush1.msra.mxu0 0.0
        %1595 = vmatprep.subr.mxu0 0.0
        %1596 = vmatpush1.msra.mxu0 0.0
        %1597 = vmatprep.subr.mxu0 0.0
        %1598 = vmatpush1.msra.mxu0 0.0
        %1599 = vmatprep.subr.mxu0 0.0
        %1600 = vmatpush1.msra.mxu0 0.0
        %1601 = vmatprep.subr.mxu0 0.0
        %1602 = vmatpush1.msra.mxu0 0.0
        %1603 = vmatprep.subr.mxu0 0.0
        %1604 = vmatpush1.msra.mxu0 0.0
        %1605 = vmatprep.subr.mxu0 0.0
        %1606 = vmatpush1.msra.mxu0 0.0
        %1607 = vmatprep.subr.mxu0 0.0
        %1608 = vmatpush1.msra.mxu0 0.0
        %1609 = vmatprep.subr.mxu0 0.0
        %1610 = vmatpush1.msra.mxu0 0.0
        %1611 = vmatprep.subr.mxu0 0.0
        %1612 = vmatpush1.msra.mxu0 0.0
        %1613 = vmatprep.subr.mxu0 0.0
        %1614 = vmatpush1.msra.mxu0 0.0
        %1615 = vmatprep.subr.mxu0 0.0
        %1616 = vmatpush1.msra.mxu0 0.0
        %1617 = vmatprep.subr.mxu0 0.0
        %1618 = vmatpush1.msra.mxu0 0.0
        %1619 = vmatprep.subr.mxu0 0.0
        %1620 = vmatpush1.msra.mxu0 0.0
        %1621 = vmatprep.subr.mxu0 0.0
        %1622 = vmatpush1.msra.mxu0 0.0
        %1623 = vmatprep.subr.mxu0 0.0
        %1624 = vmatpush1.msra.mxu0 0.0
        %1625 = vmatprep.subr.mxu0 0.0
        %1626 = vmatpush1.msra.mxu0 0.0
        %1627 = vmatprep.subr.mxu0 0.0
        %1628 = vmatpush1.msra.mxu0 0.0
        %1629 = vmatprep.subr.mxu0 0.0
        %1630 = vmatpush1.msra.mxu0 0.0
        %1631 = vmatprep.subr.mxu0 0.0
        %1632 = vmatpush1.msra.mxu0 0.0
        %1633 = vmatprep.subr.mxu0 0.0
        %1634 = vmatpush1.msra.mxu0 0.0
        %1635 = vmatprep.subr.mxu0 0.0
        %1636 = vmatpush1.msra.mxu0 0.0
        %1637 = vmatprep.subr.mxu0 0.0
        %1638 = vmatpush1.msra.mxu0 0.0
        %1639 = vmatprep.subr.mxu0 0.0
        %1640 = vmatpush1.msra.mxu0 0.0
        %1641 = vmatprep.subr.mxu0 0.0
        %1642 = vmatpush1.msra.mxu0 0.0
        %1643 = vmatprep.subr.mxu0 0.0
        %1644 = vmatpush1.msra.mxu0 0.0
        %1645 = vmatprep.subr.mxu0 0.0
        %1646 = vmatpush1.msra.mxu0 0.0
        %1647 = vmatprep.mubr.f32.mxu0 0.0
        %1648 = vmatmul.mubr.f32.gmra.mrb[0].mxu0 %v1511
        %v1649 = vpop.f32.mrb[0].mxu0
        %v1650 = vadd.f32 0.0, %v1649
        %v1651 = vpop.f32.mrb[0].mxu0
        %1652 = vdwg.mxu0
        %1653 = vmatprep.subr.mxu0 0.0
        %1654 = vmatpush1.msra.mxu0 %v1501
        %1655 = vmatprep.subr.mxu0 0.0
        %1656 = vmatpush1.msra.mxu0 %v1506
        %1657 = vmatprep.subr.mxu0 0.0
        %1658 = vmatpush1.msra.mxu0 0.0
        %1659 = vmatprep.subr.mxu0 0.0
        %1660 = vmatpush1.msra.mxu0 0.0
        %1661 = vmatprep.subr.mxu0 0.0
        %1662 = vmatpush1.msra.mxu0 0.0
        %1663 = vmatprep.subr.mxu0 0.0
        %1664 = vmatpush1.msra.mxu0 0.0
        %1665 = vmatprep.subr.mxu0 0.0
        %1666 = vmatpush1.msra.mxu0 0.0
        %1667 = vmatprep.subr.mxu0 0.0
        %1668 = vmatpush1.msra.mxu0 0.0
        %1669 = vmatprep.subr.mxu0 0.0
        %1670 = vmatpush1.msra.mxu0 0.0
        %1671 = vmatprep.subr.mxu0 0.0
        %1672 = vmatpush1.msra.mxu0 0.0
        %1673 = vmatprep.subr.mxu0 0.0
        %1674 = vmatpush1.msra.mxu0 0.0
        %1675 = vmatprep.subr.mxu0 0.0
        %1676 = vmatpush1.msra.mxu0 0.0
        %1677 = vmatprep.subr.mxu0 0.0
        %1678 = vmatpush1.msra.mxu0 0.0
        %1679 = vmatprep.subr.mxu0 0.0
        %1680 = vmatpush1.msra.mxu0 0.0
        %1681 = vmatprep.subr.mxu0 0.0
        %1682 = vmatpush1.msra.mxu0 0.0
        %1683 = vmatprep.subr.mxu0 0.0
        %1684 = vmatpush1.msra.mxu0 0.0
        %1685 = vmatprep.subr.mxu0 0.0
        %1686 = vmatpush1.msra.mxu0 0.0
        %1687 = vmatprep.subr.mxu0 0.0
        %1688 = vmatpush1.msra.mxu0 0.0
        %1689 = vmatprep.subr.mxu0 0.0
        %1690 = vmatpush1.msra.mxu0 0.0
        %1691 = vmatprep.subr.mxu0 0.0
        %1692 = vmatpush1.msra.mxu0 0.0
        %1693 = vmatprep.subr.mxu0 0.0
        %1694 = vmatpush1.msra.mxu0 0.0
        %1695 = vmatprep.subr.mxu0 0.0
        %1696 = vmatpush1.msra.mxu0 0.0
        %1697 = vmatprep.subr.mxu0 0.0
        %1698 = vmatpush1.msra.mxu0 0.0
        %1699 = vmatprep.subr.mxu0 0.0
        %1700 = vmatpush1.msra.mxu0 0.0
        %1701 = vmatprep.subr.mxu0 0.0
        %1702 = vmatpush1.msra.mxu0 0.0
        %1703 = vmatprep.subr.mxu0 0.0
        %1704 = vmatpush1.msra.mxu0 0.0
        %1705 = vmatprep.subr.mxu0 0.0
        %1706 = vmatpush1.msra.mxu0 0.0
        %1707 = vmatprep.subr.mxu0 0.0
        %1708 = vmatpush1.msra.mxu0 0.0
        %1709 = vmatprep.subr.mxu0 0.0
        %1710 = vmatpush1.msra.mxu0 0.0
        %1711 = vmatprep.subr.mxu0 0.0
        %1712 = vmatpush1.msra.mxu0 0.0
        %1713 = vmatprep.subr.mxu0 0.0
        %1714 = vmatpush1.msra.mxu0 0.0
        %1715 = vmatprep.subr.mxu0 0.0
        %1716 = vmatpush1.msra.mxu0 0.0
        %1717 = vmatprep.mubr.f32.mxu0 0.0
        %1718 = vmatmul.mubr.f32.gmra.mrb[0].mxu0 %v1511
        %v1719 = vpop.f32.mrb[0].mxu0
        %v1720 = vadd.f32 0.0, %v1719
        %v1721 = vpop.f32.mrb[0].mxu0
        %1722 = vdwg.mxu0
        %v1723 = vld [vmem:[%s1] sm:$0xff]
        %v1724 = vld [vmem:[%s1 + $0x8] sm:$0xff]
        %v1726 = vsel %vm821, %v1723, 0
        %v1729 = vsel %vm821, %v1724, 0
        %1731 = vmatprep.subr.mxu0 %v1650
        %1732 = vmatpush1.msra.mxu0 %v1580
        %1733 = vmatprep.subr.mxu0 0.0
        %1734 = vmatpush1.msra.mxu0 0.0
        %1735 = vmatprep.subr.mxu0 0.0
        %1736 = vmatpush1.msra.mxu0 0.0
        %1737 = vmatprep.subr.mxu0 0.0
        %1738 = vmatpush1.msra.mxu0 0.0
        %1739 = vmatprep.subr.mxu0 0.0
        %1740 = vmatpush1.msra.mxu0 0.0
        %1741 = vmatprep.subr.mxu0 0.0
        %1742 = vmatpush1.msra.mxu0 0.0
        %1743 = vmatprep.subr.mxu0 0.0
        %1744 = vmatpush1.msra.mxu0 0.0
        %1745 = vmatprep.subr.mxu0 0.0
        %1746 = vmatpush1.msra.mxu0 0.0
        %1747 = vmatprep.subr.mxu0 0.0
        %1748 = vmatpush1.msra.mxu0 0.0
        %1749 = vmatprep.subr.mxu0 0.0
        %1750 = vmatpush1.msra.mxu0 0.0
        %1751 = vmatprep.subr.mxu0 0.0
        %1752 = vmatpush1.msra.mxu0 0.0
        %1753 = vmatprep.subr.mxu0 0.0
        %1754 = vmatpush1.msra.mxu0 0.0
        %1755 = vmatprep.subr.mxu0 0.0
        %1756 = vmatpush1.msra.mxu0 0.0
        %1757 = vmatprep.subr.mxu0 0.0
        %1758 = vmatpush1.msra.mxu0 0.0
        %1759 = vmatprep.subr.mxu0 0.0
        %1760 = vmatpush1.msra.mxu0 0.0
        %1761 = vmatprep.subr.mxu0 0.0
        %1762 = vmatpush1.msra.mxu0 0.0
        %1763 = vmatprep.subr.mxu0 0.0
        %1764 = vmatpush1.msra.mxu0 0.0
        %1765 = vmatprep.subr.mxu0 0.0
        %1766 = vmatpush1.msra.mxu0 0.0
        %1767 = vmatprep.subr.mxu0 0.0
        %1768 = vmatpush1.msra.mxu0 0.0
        %1769 = vmatprep.subr.mxu0 0.0
        %1770 = vmatpush1.msra.mxu0 0.0
        %1771 = vmatprep.subr.mxu0 0.0
        %1772 = vmatpush1.msra.mxu0 0.0
        %1773 = vmatprep.subr.mxu0 0.0
        %1774 = vmatpush1.msra.mxu0 0.0
        %1775 = vmatprep.subr.mxu0 0.0
        %1776 = vmatpush1.msra.mxu0 0.0
        %1777 = vmatprep.subr.mxu0 0.0
        %1778 = vmatpush1.msra.mxu0 0.0
        %1779 = vmatprep.subr.mxu0 0.0
        %1780 = vmatpush1.msra.mxu0 0.0
        %1781 = vmatprep.subr.mxu0 0.0
        %1782 = vmatpush1.msra.mxu0 0.0
        %1783 = vmatprep.subr.mxu0 0.0
        %1784 = vmatpush1.msra.mxu0 0.0
        %1785 = vmatprep.subr.mxu0 0.0
        %1786 = vmatpush1.msra.mxu0 0.0
        %1787 = vmatprep.subr.mxu0 0.0
        %1788 = vmatpush1.msra.mxu0 0.0
        %1789 = vmatprep.subr.mxu0 0.0
        %1790 = vmatpush1.msra.mxu0 0.0
        %1791 = vmatprep.subr.mxu0 0.0
        %1792 = vmatpush1.msra.mxu0 0.0
        %1793 = vmatprep.subr.mxu0 0.0
        %1794 = vmatpush1.msra.mxu0 0.0
        %1795 = vmatprep.mubr.f32.mxu0 0.0
        %1796 = vmatmul.mubr.f32.gmra.mrb[0].mxu0 %v1726
        %v1797 = vpop.f32.mrb[0].mxu0
        %v1798 = vadd.f32 0.0, %v1797
        %v1799 = vpop.f32.mrb[0].mxu0
        %v1800 = vadd.f32 0.0, %v1799
        %1801 = vmatprep.mubr.f32.mxu0 0.0
        %1802 = vmatmul.mubr.f32.gmra.mrb[0].mxu0 %v1729
        %v1803 = vpop.f32.mrb[0].mxu0
        %v1804 = vadd.f32 0.0, %v1803
        %v1805 = vpop.f32.mrb[0].mxu0
        %v1806 = vadd.f32 0.0, %v1805
        %1807 = vdwg.mxu0
        %1808 = vmatprep.subr.mxu0 0.0
        %1809 = vmatpush1.msra.mxu0 %v1720
        %1810 = vmatprep.subr.mxu0 0.0
        %1811 = vmatpush1.msra.mxu0 0.0
        %1812 = vmatprep.subr.mxu0 0.0
        %1813 = vmatpush1.msra.mxu0 0.0
        %1814 = vmatprep.subr.mxu0 0.0
        %1815 = vmatpush1.msra.mxu0 0.0
        %1816 = vmatprep.subr.mxu0 0.0
        %1817 = vmatpush1.msra.mxu0 0.0
        %1818 = vmatprep.subr.mxu0 0.0
        %1819 = vmatpush1.msra.mxu0 0.0
        %1820 = vmatprep.subr.mxu0 0.0
        %1821 = vmatpush1.msra.mxu0 0.0
        %1822 = vmatprep.subr.mxu0 0.0
        %1823 = vmatpush1.msra.mxu0 0.0
        %1824 = vmatprep.subr.mxu0 0.0
        %1825 = vmatpush1.msra.mxu0 0.0
        %1826 = vmatprep.subr.mxu0 0.0
        %1827 = vmatpush1.msra.mxu0 0.0
        %1828 = vmatprep.subr.mxu0 0.0
        %1829 = vmatpush1.msra.mxu0 0.0
        %1830 = vmatprep.subr.mxu0 0.0
        %1831 = vmatpush1.msra.mxu0 0.0
        %1832 = vmatprep.subr.mxu0 0.0
        %1833 = vmatpush1.msra.mxu0 0.0
        %1834 = vmatprep.subr.mxu0 0.0
        %1835 = vmatpush1.msra.mxu0 0.0
        %1836 = vmatprep.subr.mxu0 0.0
        %1837 = vmatpush1.msra.mxu0 0.0
        %1838 = vmatprep.subr.mxu0 0.0
        %1839 = vmatpush1.msra.mxu0 0.0
        %1840 = vmatprep.subr.mxu0 0.0
        %1841 = vmatpush1.msra.mxu0 0.0
        %1842 = vmatprep.subr.mxu0 0.0
        %1843 = vmatpush1.msra.mxu0 0.0
        %1844 = vmatprep.subr.mxu0 0.0
        %1845 = vmatpush1.msra.mxu0 0.0
        %1846 = vmatprep.subr.mxu0 0.0
        %1847 = vmatpush1.msra.mxu0 0.0
        %1848 = vmatprep.subr.mxu0 0.0
        %1849 = vmatpush1.msra.mxu0 0.0
        %1850 = vmatprep.subr.mxu0 0.0
        %1851 = vmatpush1.msra.mxu0 0.0
        %1852 = vmatprep.subr.mxu0 0.0
        %1853 = vmatpush1.msra.mxu0 0.0
        %1854 = vmatprep.subr.mxu0 0.0
        %1855 = vmatpush1.msra.mxu0 0.0
        %1856 = vmatprep.subr.mxu0 0.0
        %1857 = vmatpush1.msra.mxu0 0.0
        %1858 = vmatprep.subr.mxu0 0.0
        %1859 = vmatpush1.msra.mxu0 0.0
        %1860 = vmatprep.subr.mxu0 0.0
        %1861 = vmatpush1.msra.mxu0 0.0
        %1862 = vmatprep.subr.mxu0 0.0
        %1863 = vmatpush1.msra.mxu0 0.0
        %1864 = vmatprep.subr.mxu0 0.0
        %1865 = vmatpush1.msra.mxu0 0.0
        %1866 = vmatprep.subr.mxu0 0.0
        %1867 = vmatpush1.msra.mxu0 0.0
        %1868 = vmatprep.subr.mxu0 0.0
        %1869 = vmatpush1.msra.mxu0 0.0
        %1870 = vmatprep.subr.mxu0 0.0
        %1871 = vmatpush1.msra.mxu0 0.0
        %1872 = vmatprep.mubr.f32.mxu0 0.0
        %1873 = vmatmul.mubr.f32.gmra.mrb[0].mxu0 %v1726
        %v1874 = vpop.f32.mrb[0].mxu0
        %v1875 = vadd.f32 0.0, %v1874
        %v1876 = vpop.f32.mrb[0].mxu0
        %1877 = vmatprep.mubr.f32.mxu0 0.0
        %1878 = vmatmul.mubr.f32.gmra.mrb[0].mxu0 %v1729
        %v1879 = vpop.f32.mrb[0].mxu0
        %v1880 = vadd.f32 0.0, %v1879
        %v1881 = vpop.f32.mrb[0].mxu0
        %1882 = vdwg.mxu0
        %v1883 = vadd.f32 %v1363, %v1798
        %v1884 = vadd.f32 %v1373, %v1800
        %v1885 = vadd.f32 %v1383, %v1875
        %v1886 = vadd.f32 %v1368, %v1804
        %v1887 = vadd.f32 %v1378, %v1806
        %v1888 = vadd.f32 %v1388, %v1880
        %1889 = vst [vmem:[%s597] sm:$0xff] %v1883
        %1890 = vst [vmem:[%s597 + $0x8] sm:$0xff] %v1884
        %1891 = vst [vmem:[%s597 + $0x10] sm:$0xff] %v1885
        %1892 = vst [vmem:[%s597 + $0x18] sm:$0xff] %v1886
        %1893 = vst [vmem:[%s597 + $0x20] sm:$0xff] %v1887
        %1894 = vst [vmem:[%s597 + $0x28] sm:$0xff] %v1888
        %s1895 = sand.u32 %s368, 1
        %s1896 = scalar_lea.sflag [#allocation4], %s1895
        %s1897 = sand.u32 %s368, 1
        %s1898 = smul.addr %s1897, 48
        %s1899 = scalar_lea.vmem [#allocation13], %s1898
        // Predicated region
        $region105: #{tpu_custom_call.1} parent=79 // pred_check
          %p1900 = pneg %p378
        $region106: #{tpu_custom_call.1} parent=79 // pred_check_branch
          %1902 = sbr.rel (%p1900) target = $region108
        $region107: #{tpu_custom_call.1} parent=79 // pred_region
          %s1903 = smul.u32 2, %s35
          %s1905 = ssub.s32 768, 768
          %1906 = vsyncadd %s1896, %s1905
          %s1907 = smul.addr %s1903, 3
          %s1908 = smul.addr %s1907, 128
          %s1909 = scalar_lea.hbm %s15, %s1908
          %s1910 = sshll.u32 %s1899, 4
          %s1911 = int_to_ptr.vmem [resolvable:$true] %s1910
          %1916 = dma.vmem_to_hbm [thread:$0]  %s1911, 768, %s1909, %s1896, 384, 384, 24
        $region108: #{tpu_custom_call.1} parent=79 // pred_fallthru
          _
      $region80: #{tpu_custom_call.1} parent=5 // pred_fallthru
        _
      %p1917 = scmp.le.s32.totalorder 2, %s30
      // Predicated region
      $region109: #{tpu_custom_call.1} parent=5 // pred_check
        %p1918 = pneg %p1917
      $region110: #{tpu_custom_call.1} parent=5 // pred_check_branch
        %1920 = sbr.rel (%p1918) target = $region112
      $region111: #{tpu_custom_call.1} parent=5 // pred_region
        %s1921 = ssub.s32 %s30, 2
        // Predicated region
        $region113: #{tpu_custom_call.1} parent=111 // pred_check
          %p1922 = pneg %p384
        $region114: #{tpu_custom_call.1} parent=111 // pred_check_branch
          %1924 = sbr.rel (%p1922) target = $region116
        $region115: #{tpu_custom_call.1} parent=111 // pred_region
          %s1925 = sand.u32 %s369, 1
          %s1926 = scalar_lea.sflag [#allocation4], %s1925
          %s1927 = sand.u32 %s369, 1
          %s1928 = smul.addr %s1927, 48
          %s1929 = scalar_lea.vmem [#allocation13], %s1928
          %1930 = dma.done %s1926, 768
        $region116: #{tpu_custom_call.1} parent=111 // pred_fallthru
          _
      $region112: #{tpu_custom_call.1} parent=5 // pred_fallthru
        _
    $region6: #{tpu_custom_call.1} parent=1 // loop_footer
      %s34 = sadd.s32 1, %s30
    $region7: #{tpu_custom_call.1} parent=1 // loop_footer_branch
      %29 = sbr.rel target = $region3
    $region8: #{tpu_custom_call.1} parent=1 // loop_exit
      _
    %1931 = vsyncpa [#allocation3], 1
    %s1932 = scalar_lea.sflag [#allocation3], 1
    %1933 = vsyncpa %s1932, 1
    %1934 = vsyncpa [#allocation6], 1
    %1935 = vsyncpa [#allocation9], 1
    %1936 = vsyncpa [#allocation12], 1
    %1937 = vsyncpa [#allocation4], 1
    %s1938 = scalar_lea.sflag [#allocation4], 1
    %1939 = vsyncpa %s1938, 1

</llo_original>
